<compile_context>
chip_gen: v7x
topology: tpu7x:2x2x1
jax: 0.10.0
libtpu: 0.0.40
codegen_flags: <defaults>
</compile_context>

<pallas_src>
import functools

import jax
import jax.numpy as jnp
from jax.experimental import pallas as pl
from jax.experimental.pallas import tpu as pltpu


# ---------------------------------------------------------------------------
# Glue (plain JAX): reflect padding, bilinear grid-sample, affine cropper
# ---------------------------------------------------------------------------
def reflect_coords(ix, min_val, max_val):
    # single-pass reflection, matching the PyTorch helper
    ix = jnp.where(ix > max_val, ix - 2.0 * (ix - max_val), ix)
    ix = jnp.where(ix < min_val, ix + 2.0 * (min_val - ix), ix)
    return ix


def grid_sample_bilinear_reflect(image, grid):
    """image: (N, C, IH, IW), grid: (N, H, W, 2) in [-1, 1] (x, y),
    align_corners=False, pad='reflect'.  Returns (N, C, H, W)."""
    N, C, IH, IW = image.shape
    _, H, W, _ = grid.shape
    ix = grid[..., 0]
    iy = grid[..., 1]
    ix = (1.0 + ix) * IW / 2.0 - 0.5
    iy = (1.0 + iy) * IH / 2.0 - 0.5
    bx = (-0.5, IW - 0.5)
    by = (-0.5, IH - 0.5)

    ix_nw = jnp.floor(ix)
    iy_nw = jnp.floor(iy)
    ix_ne, iy_ne = ix_nw + 1.0, iy_nw
    ix_sw, iy_sw = ix_nw, iy_nw + 1.0
    ix_se, iy_se = ix_nw + 1.0, iy_nw + 1.0

    nw = (ix_se - ix) * (iy_se - iy)
    ne = (ix - ix_sw) * (iy_sw - iy)
    sw = (ix_ne - ix) * (iy - iy_ne)
    se = (ix - ix_nw) * (iy - iy_nw)

    ix_nw = reflect_coords(ix_nw, *bx); iy_nw = reflect_coords(iy_nw, *by)
    ix_ne = reflect_coords(ix_ne, *bx); iy_ne = reflect_coords(iy_ne, *by)
    ix_sw = reflect_coords(ix_sw, *bx); iy_sw = reflect_coords(iy_sw, *by)
    ix_se = reflect_coords(ix_se, *bx); iy_se = reflect_coords(iy_se, *by)

    img_flat = image.reshape(N, C, IH * IW)

    def gather(iy_c, ix_c):
        idx = (iy_c * IW + ix_c).astype(jnp.int32).reshape(N, 1, H * W)
        idx = jnp.broadcast_to(idx, (N, C, H * W))
        return jnp.take_along_axis(img_flat, idx, axis=2).reshape(N, C, H, W)

    out = (gather(iy_nw, ix_nw) * nw[:, None]
           + gather(iy_ne, ix_ne) * ne[:, None]
           + gather(iy_sw, ix_sw) * sw[:, None]
           + gather(iy_se, ix_se) * se[:, None])
    return out


def cropper(image, coordinate, ws1, ws2, output_size):
    """Spatial-transformer crop: image (b, c, h, w), coordinate (b, p, 2)
    -> (b*p, c, output_size, output_size)."""
    b, c, h, w = image.shape
    b_pixels = coordinate.shape[1]
    d_coordinate = coordinate * 2.0
    crop_size = 2.0 * (output_size - 1) / (h - 1)
    a = (crop_size / 2.0) * ws1          # theta[0,0]
    d = (crop_size / 2.0) * ws2          # theta[1,1]
    tx = d_coordinate[:, :, 1]           # theta[0,2]
    ty = d_coordinate[:, :, 0]           # theta[1,2]

    # F.affine_grid base coords, align_corners=False: (2i+1)/S - 1
    base = (2.0 * jnp.arange(output_size, dtype=jnp.float32) + 1.0) / output_size - 1.0
    gx = a * base[None, None, None, :] + tx[:, :, None, None]
    gx = jnp.broadcast_to(gx, (b, b_pixels, output_size, output_size))
    gy = d * base[None, None, :, None] + ty[:, :, None, None]
    gy = jnp.broadcast_to(gy, (b, b_pixels, output_size, output_size))
    f = jnp.stack([gx, gy], axis=-1)                                  # (b,p,S,S,2)
    f = f.reshape(b, b_pixels * output_size, output_size, 2)

    sampled = grid_sample_bilinear_reflect(image, f)                  # (b,c,p*S,S)
    sampled = jnp.transpose(sampled, (0, 2, 3, 1))                    # (b,p*S,S,c)
    sampled = sampled.reshape(b, b_pixels, output_size, output_size, c)
    sampled = sampled.reshape(b * b_pixels, output_size, output_size, c)
    sampled = jnp.transpose(sampled, (0, 3, 1, 2))                    # (b*p,c,S,S)
    return sampled


# ---------------------------------------------------------------------------
# Pallas kernel: fused 10-layer MLP (relu) + residual mid-pixel add
#   - x arrives f32 / unpadded, cast to bf16 in-kernel; f32 MXU accumulation
#   - biases stacked into one (n_layers, 512) input, statically sliced in-kernel
#   - natural-width (c) f32 output; residual added at f32 precision
# ---------------------------------------------------------------------------
def _mlp_kernel(n_layers, hidden_units, x_ref, mid_ref, b_ref, *rest):
    w_refs = rest[:n_layers]
    o_ref = rest[n_layers]

    h = x_ref[...].astype(jnp.bfloat16)               # (tile_m, Din) bf16
    for i in range(n_layers):
        hu = hidden_units[i]
        b_i = b_ref[i:i + 1, :hu]                      # (1, hu) f32, static slice
        h = jnp.dot(h, w_refs[i][...],
                    preferred_element_type=jnp.float32) + b_i
        if i < n_layers - 1:
            h = jnp.maximum(h, 0.0).astype(jnp.bfloat16)
    # h is f32 (tile_m, c); residual is f32 (tile_m, c).
    o_ref[...] = h + mid_ref[...]


def _round_up(v, m):
    return ((v + m - 1) // m) * m


def _default_tile_m():
    # v5e is ~4x more MXU-cycle-bound -> smaller tiles suffice; v6e/v7x want big
    # tiles to amortize the ~0.35 us per-grid-step overhead.
    try:
        kind = jax.devices()[0].device_kind.lower()
        if "v5 lite" in kind or "v5e" in kind or "v5lite" in kind:
            return 512
    except Exception:
        pass
    return 1024


def mlp_pallas(x, mid, Ws, Bs, *, tile_m=None):
    """x: (M, Din) f32, mid: (M, c) f32, Ws[i]: (in_i, out_i), Bs[i]: (out_i,).
    Returns (M, c) f32."""
    M, Din = x.shape
    c = mid.shape[1]
    n_layers = len(Ws)
    hidden_units = tuple(int(w.shape[1]) for w in Ws)

    if tile_m is None:
        tile_m = _default_tile_m()

    # Row tiling: at least 2 grid steps when the problem is big enough so the
    # "parallel" axis actually splits across both TensorCores on v7x.
    M8 = _round_up(M, 8)
    half = (M8 // 2) // 256 * 256
    if half >= 256:
        tile = min(tile_m, half)
    else:
        tile = M8                         # tiny problem: single tile
    M_pad = _round_up(M8, tile)

    x = x.astype(jnp.float32)
    mid = mid.astype(jnp.float32)
    if M_pad != M:
        x = jnp.pad(x, ((0, M_pad - M), (0, 0)))
        mid = jnp.pad(mid, ((0, M_pad - M), (0, 0)))

    # Weights: bf16 MXU operands (cast once in the wrapper; grid-invariant blocks).
    Ws_bf16 = [w.astype(jnp.bfloat16) for w in Ws]

    # Biases: one stacked (n_layers, max_width) f32 operand.
    max_w = max(hidden_units)
    b_all = jnp.zeros((n_layers, max_w), jnp.float32)
    for i, bvec in enumerate(Bs):
        b_all = b_all.at[i, :hidden_units[i]].set(bvec.astype(jnp.float32))

    in_specs = [
        pl.BlockSpec((tile, Din), lambda i: (i, 0)),          # x rows (f32, unpadded K)
        pl.BlockSpec((tile, c), lambda i: (i, 0)),            # residual rows (width c)
        pl.BlockSpec((n_layers, max_w), lambda i: (0, 0)),    # stacked biases
    ]
    for w in Ws_bf16:                                         # grid-invariant weights
        in_specs.append(pl.BlockSpec(w.shape, lambda i: (0, 0)))

    out = pl.pallas_call(
        functools.partial(_mlp_kernel, n_layers, hidden_units),
        out_shape=jax.ShapeDtypeStruct((M_pad, c), jnp.float32),
        grid=(M_pad // tile,),
        in_specs=in_specs,
        out_specs=pl.BlockSpec((tile, c), lambda i: (i, 0)),
        compiler_params=pltpu.CompilerParams(
            dimension_semantics=("parallel",)),   # independent row tiles -> 2 TCs on v7x
    )(x, mid, b_all, *Ws_bf16)
    return out[:M] if M_pad != M else out


# ---------------------------------------------------------------------------
# Full FunkNN forward
# ---------------------------------------------------------------------------
W_SIZE = 9


def init_params(key, c):
    """Deterministic MLP init (torch.nn.Linear-style uniform bounds)."""
    prev_unit = W_SIZE * W_SIZE * c
    hidden_units = [512, 512, 256, 256, 128, 128, 64, 64, 64, c]
    Ws, Bs = [], []
    for h in hidden_units:
        key, kw, kb = jax.random.split(key, 3)
        bound = 1.0 / jnp.sqrt(prev_unit)
        Ws.append(jax.random.uniform(kw, (prev_unit, h), jnp.float32, -bound, bound))
        Bs.append(jax.random.uniform(kb, (h,), jnp.float32, -bound, bound))
        prev_unit = h
    return dict(Ws=Ws, Bs=Bs, ws1=jnp.float32(1.0), ws2=jnp.float32(1.0))


def funknn_forward(params, coordinate, image):
    """coordinate: (b, b_pixels, 2), image: (b, c, h, w) -> (b, b_pixels, c)."""
    b, b_pixels, _ = coordinate.shape
    c = image.shape[1]
    patches = cropper(image, coordinate, params["ws1"], params["ws2"], W_SIZE)  # (M,c,9,9)
    mid_pix = patches[:, :, 4, 4]                                                # (M,c) f32
    x = patches.reshape(b * b_pixels, c * W_SIZE * W_SIZE)                       # torch.flatten(x,1)
    out = mlp_pallas(x, mid_pix, params["Ws"], params["Bs"])
    return out.reshape(b, b_pixels, c)


# ---------------------------------------------------------------------------
# Pure-JAX references (for correctness checks)
# ---------------------------------------------------------------------------
def _mlp_reference_f32(x, mid, Ws, Bs):
    h = x
    for i in range(len(Ws)):
        h = h @ Ws[i] + Bs[i]
        if i < len(Ws) - 1:
            h = jnp.maximum(h, 0.0)
    return h + mid


def _mlp_reference_bf16(x, mid, Ws, Bs):
    """Mimics the kernel's bf16-operand / f32-accumulation numerics."""
    h = x.astype(jnp.bfloat16)
    for i in range(len(Ws)):
        h = jnp.dot(h, Ws[i].astype(jnp.bfloat16),
                    preferred_element_type=jnp.float32) + Bs[i]
        if i < len(Ws) - 1:
            h = jnp.maximum(h, 0.0).astype(jnp.bfloat16)
    return h + mid


if __name__ == "__main__":
    key = jax.random.PRNGKey(0)
    b, b_pixels, c, hw = 2, 8, 4, 16

    k_img, k_coord, k_param = jax.random.split(key, 3)
    image = jax.random.normal(k_img, (b, c, hw, hw), jnp.float32)
    coordinate = jax.random.uniform(k_coord, (b, b_pixels, 2), jnp.float32, -0.5, 0.5)
    params = init_params(k_param, c)

    fwd = jax.jit(funknn_forward)
    out = fwd(params, coordinate, image)
    out = jax.block_until_ready(out)
    assert out.shape == (b, b_pixels, c), out.shape

    # sanity: Pallas MLP vs pure-JAX MLP on the same cropped patches
    patches = cropper(image, coordinate, params["ws1"], params["ws2"], W_SIZE)
    mid_pix = patches[:, :, 4, 4]
    x_flat = patches.reshape(b * b_pixels, c * W_SIZE * W_SIZE)

    ref_bf16 = _mlp_reference_bf16(x_flat, mid_pix, params["Ws"], params["Bs"])
    ref_bf16 = ref_bf16.reshape(b, b_pixels, c)
    assert jnp.allclose(out, ref_bf16, rtol=2e-3, atol=2e-3), \
        float(jnp.abs(out - ref_bf16).max())

    ref_f32 = _mlp_reference_f32(x_flat, mid_pix, params["Ws"], params["Bs"])
    ref_f32 = ref_f32.reshape(b, b_pixels, c)
    assert jnp.allclose(out, ref_f32, rtol=5e-2, atol=5e-2), \
        float(jnp.abs(out - ref_f32).max())

    print("KERNEL_OK")
</pallas_src>

<mosaic_0001>
module attributes {stable_mosaic.version = 11 : i64} {
  func.func @_mlp_kernel(%arg0: i32, %arg1: memref<16x324xf32, #tpu.memory_space<vmem>>, %arg2: memref<16x4xf32, #tpu.memory_space<vmem>>, %arg3: memref<10x512xf32, #tpu.memory_space<vmem>>, %arg4: memref<324x512xbf16, #tpu.memory_space<vmem>>, %arg5: memref<512x512xbf16, #tpu.memory_space<vmem>>, %arg6: memref<512x256xbf16, #tpu.memory_space<vmem>>, %arg7: memref<256x256xbf16, #tpu.memory_space<vmem>>, %arg8: memref<256x128xbf16, #tpu.memory_space<vmem>>, %arg9: memref<128x128xbf16, #tpu.memory_space<vmem>>, %arg10: memref<128x64xbf16, #tpu.memory_space<vmem>>, %arg11: memref<64x64xbf16, #tpu.memory_space<vmem>>, %arg12: memref<64x64xbf16, #tpu.memory_space<vmem>>, %arg13: memref<64x4xbf16, #tpu.memory_space<vmem>>, %arg14: memref<16x4xf32, #tpu.memory_space<vmem>>) attributes {dimension_semantics = [#tpu.dimension_semantics<parallel>], iteration_bounds = array<i64: 1>, scalar_prefetch = 0 : i64, scratch_operands = 0 : i64, tpu.core_type = #tpu.core_type<tc>, window_params = [{transform_indices = @transform_0, window_bounds = array<i64: 16, 324>}, {transform_indices = @transform_1, window_bounds = array<i64: 16, 4>}, {pipeline_mode = #tpu.pipeline_mode<synchronous>, transform_indices = @transform_2, window_bounds = array<i64: 10, 512>}, {pipeline_mode = #tpu.pipeline_mode<synchronous>, transform_indices = @transform_3, window_bounds = array<i64: 324, 512>}, {pipeline_mode = #tpu.pipeline_mode<synchronous>, transform_indices = @transform_4, window_bounds = array<i64: 512, 512>}, {pipeline_mode = #tpu.pipeline_mode<synchronous>, transform_indices = @transform_5, window_bounds = array<i64: 512, 256>}, {pipeline_mode = #tpu.pipeline_mode<synchronous>, transform_indices = @transform_6, window_bounds = array<i64: 256, 256>}, {pipeline_mode = #tpu.pipeline_mode<synchronous>, transform_indices = @transform_7, window_bounds = array<i64: 256, 128>}, {pipeline_mode = #tpu.pipeline_mode<synchronous>, transform_indices = @transform_8, window_bounds = array<i64: 128, 128>}, {pipeline_mode = #tpu.pipeline_mode<synchronous>, transform_indices = @transform_9, window_bounds = array<i64: 128, 64>}, {pipeline_mode = #tpu.pipeline_mode<synchronous>, transform_indices = @transform_10, window_bounds = array<i64: 64, 64>}, {pipeline_mode = #tpu.pipeline_mode<synchronous>, transform_indices = @transform_11, window_bounds = array<i64: 64, 64>}, {pipeline_mode = #tpu.pipeline_mode<synchronous>, transform_indices = @transform_12, window_bounds = array<i64: 64, 4>}, {transform_indices = @transform_13, window_bounds = array<i64: 16, 4>}]} {
    %c0 = arith.constant 0 : index
    %c0_0 = arith.constant 0 : index
    %0 = vector.load %arg1[%c0, %c0_0] : memref<16x324xf32, #tpu.memory_space<vmem>>, vector<16x324xf32>
    %1 = arith.truncf %0 : vector<16x324xf32> to vector<16x324xbf16>
    %c0_1 = arith.constant 0 : index
    %c0_2 = arith.constant 0 : index
    %2 = vector.load %arg3[%c0_1, %c0_2] : memref<10x512xf32, #tpu.memory_space<vmem>>, vector<1x512xf32>
    %c0_3 = arith.constant 0 : index
    %c0_4 = arith.constant 0 : index
    %3 = vector.load %arg4[%c0_3, %c0_4] : memref<324x512xbf16, #tpu.memory_space<vmem>>, vector<324x512xbf16>
    %cst = arith.constant dense<0.000000e+00> : vector<16x512xf32>
    %4 = tpu.matmul %1, %3, %cst {dimension_numbers = #tpu.dot_dimension_numbers<[1], [0], [0], [1], [0, 0, 1, 1], [], []>} : vector<16x324xbf16>, vector<324x512xbf16>, vector<16x512xf32> -> vector<16x512xf32>
    %5 = vector.broadcast %2 : vector<1x512xf32> to vector<16x512xf32>
    %6 = arith.addf %4, %5 : vector<16x512xf32>
    %cst_5 = arith.constant 0.000000e+00 : f32
    %7 = vector.broadcast %cst_5 : f32 to vector<16x512xf32>
    %8 = arith.maximumf %6, %7 : vector<16x512xf32>
    %9 = arith.truncf %8 : vector<16x512xf32> to vector<16x512xbf16>
    %c1 = arith.constant 1 : index
    %c0_6 = arith.constant 0 : index
    %10 = vector.load %arg3[%c1, %c0_6] : memref<10x512xf32, #tpu.memory_space<vmem>>, vector<1x512xf32>
    %c0_7 = arith.constant 0 : index
    %c0_8 = arith.constant 0 : index
    %11 = vector.load %arg5[%c0_7, %c0_8] : memref<512x512xbf16, #tpu.memory_space<vmem>>, vector<512x512xbf16>
    %cst_9 = arith.constant dense<0.000000e+00> : vector<16x512xf32>
    %12 = tpu.matmul %9, %11, %cst_9 {dimension_numbers = #tpu.dot_dimension_numbers<[1], [0], [0], [1], [0, 0, 1, 1], [], []>} : vector<16x512xbf16>, vector<512x512xbf16>, vector<16x512xf32> -> vector<16x512xf32>
    %13 = vector.broadcast %10 : vector<1x512xf32> to vector<16x512xf32>
    %14 = arith.addf %12, %13 : vector<16x512xf32>
    %cst_10 = arith.constant 0.000000e+00 : f32
    %15 = vector.broadcast %cst_10 : f32 to vector<16x512xf32>
    %16 = arith.maximumf %14, %15 : vector<16x512xf32>
    %17 = arith.truncf %16 : vector<16x512xf32> to vector<16x512xbf16>
    %c2 = arith.constant 2 : index
    %c0_11 = arith.constant 0 : index
    %18 = vector.load %arg3[%c2, %c0_11] : memref<10x512xf32, #tpu.memory_space<vmem>>, vector<1x256xf32>
    %c0_12 = arith.constant 0 : index
    %c0_13 = arith.constant 0 : index
    %19 = vector.load %arg6[%c0_12, %c0_13] : memref<512x256xbf16, #tpu.memory_space<vmem>>, vector<512x256xbf16>
    %cst_14 = arith.constant dense<0.000000e+00> : vector<16x256xf32>
    %20 = tpu.matmul %17, %19, %cst_14 {dimension_numbers = #tpu.dot_dimension_numbers<[1], [0], [0], [1], [0, 0, 1, 1], [], []>} : vector<16x512xbf16>, vector<512x256xbf16>, vector<16x256xf32> -> vector<16x256xf32>
    %21 = vector.broadcast %18 : vector<1x256xf32> to vector<16x256xf32>
    %22 = arith.addf %20, %21 : vector<16x256xf32>
    %cst_15 = arith.constant 0.000000e+00 : f32
    %23 = vector.broadcast %cst_15 : f32 to vector<16x256xf32>
    %24 = arith.maximumf %22, %23 : vector<16x256xf32>
    %25 = arith.truncf %24 : vector<16x256xf32> to vector<16x256xbf16>
    %c3 = arith.constant 3 : index
    %c0_16 = arith.constant 0 : index
    %26 = vector.load %arg3[%c3, %c0_16] : memref<10x512xf32, #tpu.memory_space<vmem>>, vector<1x256xf32>
    %c0_17 = arith.constant 0 : index
    %c0_18 = arith.constant 0 : index
    %27 = vector.load %arg7[%c0_17, %c0_18] : memref<256x256xbf16, #tpu.memory_space<vmem>>, vector<256x256xbf16>
    %cst_19 = arith.constant dense<0.000000e+00> : vector<16x256xf32>
    %28 = tpu.matmul %25, %27, %cst_19 {dimension_numbers = #tpu.dot_dimension_numbers<[1], [0], [0], [1], [0, 0, 1, 1], [], []>} : vector<16x256xbf16>, vector<256x256xbf16>, vector<16x256xf32> -> vector<16x256xf32>
    %29 = vector.broadcast %26 : vector<1x256xf32> to vector<16x256xf32>
    %30 = arith.addf %28, %29 : vector<16x256xf32>
    %cst_20 = arith.constant 0.000000e+00 : f32
    %31 = vector.broadcast %cst_20 : f32 to vector<16x256xf32>
    %32 = arith.maximumf %30, %31 : vector<16x256xf32>
    %33 = arith.truncf %32 : vector<16x256xf32> to vector<16x256xbf16>
    %c4 = arith.constant 4 : index
    %c0_21 = arith.constant 0 : index
    %34 = vector.load %arg3[%c4, %c0_21] : memref<10x512xf32, #tpu.memory_space<vmem>>, vector<1x128xf32>
    %c0_22 = arith.constant 0 : index
    %c0_23 = arith.constant 0 : index
    %35 = vector.load %arg8[%c0_22, %c0_23] : memref<256x128xbf16, #tpu.memory_space<vmem>>, vector<256x128xbf16>
    %cst_24 = arith.constant dense<0.000000e+00> : vector<16x128xf32>
    %36 = tpu.matmul %33, %35, %cst_24 {dimension_numbers = #tpu.dot_dimension_numbers<[1], [0], [0], [1], [0, 0, 1, 1], [], []>} : vector<16x256xbf16>, vector<256x128xbf16>, vector<16x128xf32> -> vector<16x128xf32>
    %37 = vector.broadcast %34 : vector<1x128xf32> to vector<16x128xf32>
    %38 = arith.addf %36, %37 : vector<16x128xf32>
    %cst_25 = arith.constant 0.000000e+00 : f32
    %39 = vector.broadcast %cst_25 : f32 to vector<16x128xf32>
    %40 = arith.maximumf %38, %39 : vector<16x128xf32>
    %41 = arith.truncf %40 : vector<16x128xf32> to vector<16x128xbf16>
    %c5 = arith.constant 5 : index
    %c0_26 = arith.constant 0 : index
    %42 = vector.load %arg3[%c5, %c0_26] : memref<10x512xf32, #tpu.memory_space<vmem>>, vector<1x128xf32>
    %c0_27 = arith.constant 0 : index
    %c0_28 = arith.constant 0 : index
    %43 = vector.load %arg9[%c0_27, %c0_28] : memref<128x128xbf16, #tpu.memory_space<vmem>>, vector<128x128xbf16>
    %cst_29 = arith.constant dense<0.000000e+00> : vector<16x128xf32>
    %44 = tpu.matmul %41, %43, %cst_29 {dimension_numbers = #tpu.dot_dimension_numbers<[1], [0], [0], [1], [0, 0, 1, 1], [], []>} : vector<16x128xbf16>, vector<128x128xbf16>, vector<16x128xf32> -> vector<16x128xf32>
    %45 = vector.broadcast %42 : vector<1x128xf32> to vector<16x128xf32>
    %46 = arith.addf %44, %45 : vector<16x128xf32>
    %cst_30 = arith.constant 0.000000e+00 : f32
    %47 = vector.broadcast %cst_30 : f32 to vector<16x128xf32>
    %48 = arith.maximumf %46, %47 : vector<16x128xf32>
    %49 = arith.truncf %48 : vector<16x128xf32> to vector<16x128xbf16>
    %c6 = arith.constant 6 : index
    %c0_31 = arith.constant 0 : index
    %50 = vector.load %arg3[%c6, %c0_31] : memref<10x512xf32, #tpu.memory_space<vmem>>, vector<1x64xf32>
    %c0_32 = arith.constant 0 : index
    %c0_33 = arith.constant 0 : index
    %51 = vector.load %arg10[%c0_32, %c0_33] : memref<128x64xbf16, #tpu.memory_space<vmem>>, vector<128x64xbf16>
    %cst_34 = arith.constant dense<0.000000e+00> : vector<16x64xf32>
    %52 = tpu.matmul %49, %51, %cst_34 {dimension_numbers = #tpu.dot_dimension_numbers<[1], [0], [0], [1], [0, 0, 1, 1], [], []>} : vector<16x128xbf16>, vector<128x64xbf16>, vector<16x64xf32> -> vector<16x64xf32>
    %53 = vector.broadcast %50 : vector<1x64xf32> to vector<16x64xf32>
    %54 = arith.addf %52, %53 : vector<16x64xf32>
    %cst_35 = arith.constant 0.000000e+00 : f32
    %55 = vector.broadcast %cst_35 : f32 to vector<16x64xf32>
    %56 = arith.maximumf %54, %55 : vector<16x64xf32>
    %57 = arith.truncf %56 : vector<16x64xf32> to vector<16x64xbf16>
    %c7 = arith.constant 7 : index
    %c0_36 = arith.constant 0 : index
    %58 = vector.load %arg3[%c7, %c0_36] : memref<10x512xf32, #tpu.memory_space<vmem>>, vector<1x64xf32>
    %c0_37 = arith.constant 0 : index
    %c0_38 = arith.constant 0 : index
    %59 = vector.load %arg11[%c0_37, %c0_38] : memref<64x64xbf16, #tpu.memory_space<vmem>>, vector<64x64xbf16>
    %cst_39 = arith.constant dense<0.000000e+00> : vector<16x64xf32>
    %60 = tpu.matmul %57, %59, %cst_39 {dimension_numbers = #tpu.dot_dimension_numbers<[1], [0], [0], [1], [0, 0, 1, 1], [], []>} : vector<16x64xbf16>, vector<64x64xbf16>, vector<16x64xf32> -> vector<16x64xf32>
    %61 = vector.broadcast %58 : vector<1x64xf32> to vector<16x64xf32>
    %62 = arith.addf %60, %61 : vector<16x64xf32>
    %cst_40 = arith.constant 0.000000e+00 : f32
    %63 = vector.broadcast %cst_40 : f32 to vector<16x64xf32>
    %64 = arith.maximumf %62, %63 : vector<16x64xf32>
    %65 = arith.truncf %64 : vector<16x64xf32> to vector<16x64xbf16>
    %c8 = arith.constant 8 : index
    %c0_41 = arith.constant 0 : index
    %66 = vector.load %arg3[%c8, %c0_41] : memref<10x512xf32, #tpu.memory_space<vmem>>, vector<1x64xf32>
    %c0_42 = arith.constant 0 : index
    %c0_43 = arith.constant 0 : index
    %67 = vector.load %arg12[%c0_42, %c0_43] : memref<64x64xbf16, #tpu.memory_space<vmem>>, vector<64x64xbf16>
    %cst_44 = arith.constant dense<0.000000e+00> : vector<16x64xf32>
    %68 = tpu.matmul %65, %67, %cst_44 {dimension_numbers = #tpu.dot_dimension_numbers<[1], [0], [0], [1], [0, 0, 1, 1], [], []>} : vector<16x64xbf16>, vector<64x64xbf16>, vector<16x64xf32> -> vector<16x64xf32>
    %69 = vector.broadcast %66 : vector<1x64xf32> to vector<16x64xf32>
    %70 = arith.addf %68, %69 : vector<16x64xf32>
    %cst_45 = arith.constant 0.000000e+00 : f32
    %71 = vector.broadcast %cst_45 : f32 to vector<16x64xf32>
    %72 = arith.maximumf %70, %71 : vector<16x64xf32>
    %73 = arith.truncf %72 : vector<16x64xf32> to vector<16x64xbf16>
    %c9 = arith.constant 9 : index
    %c0_46 = arith.constant 0 : index
    %74 = vector.load %arg3[%c9, %c0_46] : memref<10x512xf32, #tpu.memory_space<vmem>>, vector<1x4xf32>
    %c0_47 = arith.constant 0 : index
    %c0_48 = arith.constant 0 : index
    %75 = vector.load %arg13[%c0_47, %c0_48] : memref<64x4xbf16, #tpu.memory_space<vmem>>, vector<64x4xbf16>
    %cst_49 = arith.constant dense<0.000000e+00> : vector<16x4xf32>
    %76 = tpu.matmul %73, %75, %cst_49 {dimension_numbers = #tpu.dot_dimension_numbers<[1], [0], [0], [1], [0, 0, 1, 1], [], []>} : vector<16x64xbf16>, vector<64x4xbf16>, vector<16x4xf32> -> vector<16x4xf32>
    %77 = vector.broadcast %74 : vector<1x4xf32> to vector<16x4xf32>
    %78 = arith.addf %76, %77 : vector<16x4xf32>
    %c0_50 = arith.constant 0 : index
    %c0_51 = arith.constant 0 : index
    %79 = vector.load %arg2[%c0_50, %c0_51] : memref<16x4xf32, #tpu.memory_space<vmem>>, vector<16x4xf32>
    %80 = arith.addf %78, %79 : vector<16x4xf32>
    %c0_52 = arith.constant 0 : index
    %c0_53 = arith.constant 0 : index
    %81 = vector.load %arg14[%c0_52, %c0_53] : memref<16x4xf32, #tpu.memory_space<vmem>>, vector<16x4xf32>
    tpu.vector_store %arg14[%c0_52, %c0_53], %80 {strides = array<i32>} : memref<16x4xf32, #tpu.memory_space<vmem>>, vector<16x4xf32>,
    return
  }
  func.func @transform_0(%arg0: i32) -> (i32, i32) {
    %c0_i32 = arith.constant 0 : i32
    %c0_i32_0 = arith.constant 0 : i32
    return %arg0, %c0_i32 : i32, i32
  }
  func.func @transform_1(%arg0: i32) -> (i32, i32) {
    %c0_i32 = arith.constant 0 : i32
    %c0_i32_0 = arith.constant 0 : i32
    return %arg0, %c0_i32 : i32, i32
  }
  func.func @transform_2(%arg0: i32) -> (i32, i32) {
    %c0_i32 = arith.constant 0 : i32
    %c0_i32_0 = arith.constant 0 : i32
    %c0_i32_1 = arith.constant 0 : i32
    return %c0_i32, %c0_i32_0 : i32, i32
  }
  func.func @transform_3(%arg0: i32) -> (i32, i32) {
    %c0_i32 = arith.constant 0 : i32
    %c0_i32_0 = arith.constant 0 : i32
    %c0_i32_1 = arith.constant 0 : i32
    return %c0_i32, %c0_i32_0 : i32, i32
  }
  func.func @transform_4(%arg0: i32) -> (i32, i32) {
    %c0_i32 = arith.constant 0 : i32
    %c0_i32_0 = arith.constant 0 : i32
    %c0_i32_1 = arith.constant 0 : i32
    return %c0_i32, %c0_i32_0 : i32, i32
  }
  func.func @transform_5(%arg0: i32) -> (i32, i32) {
    %c0_i32 = arith.constant 0 : i32
    %c0_i32_0 = arith.constant 0 : i32
    %c0_i32_1 = arith.constant 0 : i32
    return %c0_i32, %c0_i32_0 : i32, i32
  }
  func.func @transform_6(%arg0: i32) -> (i32, i32) {
    %c0_i32 = arith.constant 0 : i32
    %c0_i32_0 = arith.constant 0 : i32
    %c0_i32_1 = arith.constant 0 : i32
    return %c0_i32, %c0_i32_0 : i32, i32
  }
  func.func @transform_7(%arg0: i32) -> (i32, i32) {
    %c0_i32 = arith.constant 0 : i32
    %c0_i32_0 = arith.constant 0 : i32
    %c0_i32_1 = arith.constant 0 : i32
    return %c0_i32, %c0_i32_0 : i32, i32
  }
  func.func @transform_8(%arg0: i32) -> (i32, i32) {
    %c0_i32 = arith.constant 0 : i32
    %c0_i32_0 = arith.constant 0 : i32
    %c0_i32_1 = arith.constant 0 : i32
    return %c0_i32, %c0_i32_0 : i32, i32
  }
  func.func @transform_9(%arg0: i32) -> (i32, i32) {
    %c0_i32 = arith.constant 0 : i32
    %c0_i32_0 = arith.constant 0 : i32
    %c0_i32_1 = arith.constant 0 : i32
    return %c0_i32, %c0_i32_0 : i32, i32
  }
  func.func @transform_10(%arg0: i32) -> (i32, i32) {
    %c0_i32 = arith.constant 0 : i32
    %c0_i32_0 = arith.constant 0 : i32
    %c0_i32_1 = arith.constant 0 : i32
    return %c0_i32, %c0_i32_0 : i32, i32
  }
  func.func @transform_11(%arg0: i32) -> (i32, i32) {
    %c0_i32 = arith.constant 0 : i32
    %c0_i32_0 = arith.constant 0 : i32
    %c0_i32_1 = arith.constant 0 : i32
    return %c0_i32, %c0_i32_0 : i32, i32
  }
  func.func @transform_12(%arg0: i32) -> (i32, i32) {
    %c0_i32 = arith.constant 0 : i32
    %c0_i32_0 = arith.constant 0 : i32
    %c0_i32_1 = arith.constant 0 : i32
    return %c0_i32, %c0_i32_0 : i32, i32
  }
  func.func @transform_13(%arg0: i32) -> (i32, i32) {
    %c0_i32 = arith.constant 0 : i32
    %c0_i32_0 = arith.constant 0 : i32
    return %arg0, %c0_i32 : i32, i32
  }
}

</mosaic_0001>

<llo_original>
// kernel: funknn_forward.1
$region0: #{funknn_forward.1}
  #allocation0 [shape = 'u32[]', space=smem, size = 0x4, offset = 0x4, fixed_abs, tag = 'smem constant byte address 0x4 - core index']
  #allocation1 [shape = 'u32[144,128]{1,0:T(1,128)}', space=vmem, size = 0x12000, scoped, tag = 'internal scratch']
  %s0 = inlined_call_operand.vmem [shape: f32[16,324], index: 0, kind: input, shape index: {}]
  %s1 = inlined_call_operand.vmem [shape: f32[16,4], index: 1, kind: input, shape index: {}]
  %s2 = inlined_call_operand.vmem [shape: f32[10,512], index: 2, kind: input, shape index: {}]
  %s3 = inlined_call_operand.vmem [shape: bf16[324,512], index: 3, kind: input, shape index: {}]
  %s4 = inlined_call_operand.vmem [shape: bf16[512,512], index: 4, kind: input, shape index: {}]
  %s5 = inlined_call_operand.vmem [shape: bf16[512,256], index: 5, kind: input, shape index: {}]
  %s6 = inlined_call_operand.vmem [shape: bf16[256,256], index: 6, kind: input, shape index: {}]
  %s7 = inlined_call_operand.vmem [shape: bf16[256,128], index: 7, kind: input, shape index: {}]
  %s8 = inlined_call_operand.vmem [shape: bf16[128,128], index: 8, kind: input, shape index: {}]
  %s9 = inlined_call_operand.vmem [shape: bf16[128,64], index: 9, kind: input, shape index: {}]
  %s10 = inlined_call_operand.vmem [shape: bf16[64,64], index: 10, kind: input, shape index: {}]
  %s11 = inlined_call_operand.vmem [shape: bf16[64,64], index: 11, kind: input, shape index: {}]
  %s12 = inlined_call_operand.vmem [shape: bf16[64,4], index: 12, kind: input, shape index: {}]
  %s13 = inlined_call_operand.vmem [shape: f32[16,4], index: 13, kind: output, shape index: {}]
  %s14 = sld [smem:[#allocation0]]
  $region62: #{funknn_forward.1} parent=0
    _
  %s16 = ssub.s32 1, %s14
  %s17 = scalar_select 0, %s16, %s14
  // Predicated region
  $region2: #{funknn_forward.1} parent=0 // pred_check
    _
  $region3: #{funknn_forward.1} parent=0 // pred_check_branch
    %19 = sbr.rel (0) target = $region5
  $region4: #{funknn_forward.1} parent=0 // pred_region
    _
  $region5: #{funknn_forward.1} parent=0 // pred_fallthru
    _
  // Predicated region
  $region6: #{funknn_forward.1} parent=0 // pred_check
    _
  $region7: #{funknn_forward.1} parent=0 // pred_check_branch
    %21 = sbr.rel (0) target = $region9
  $region8: #{funknn_forward.1} parent=0 // pred_region
    _
  $region9: #{funknn_forward.1} parent=0 // pred_fallthru
    _
  // Predicated region
  $region10: #{funknn_forward.1} parent=0 // pred_check
    _
  $region11: #{funknn_forward.1} parent=0 // pred_check_branch
    %23 = sbr.rel (0) target = $region13
  $region12: #{funknn_forward.1} parent=0 // pred_region
    _
  $region13: #{funknn_forward.1} parent=0 // pred_fallthru
    _
  // Predicated region
  $region14: #{funknn_forward.1} parent=0 // pred_check
    _
  $region15: #{funknn_forward.1} parent=0 // pred_check_branch
    %25 = sbr.rel (0) target = $region17
  $region16: #{funknn_forward.1} parent=0 // pred_region
    _
  $region17: #{funknn_forward.1} parent=0 // pred_fallthru
    _
  // Predicated region
  $region18: #{funknn_forward.1} parent=0 // pred_check
    _
  $region19: #{funknn_forward.1} parent=0 // pred_check_branch
    %27 = sbr.rel (0) target = $region21
  $region20: #{funknn_forward.1} parent=0 // pred_region
    _
  $region21: #{funknn_forward.1} parent=0 // pred_fallthru
    _
  // Predicated region
  $region22: #{funknn_forward.1} parent=0 // pred_check
    _
  $region23: #{funknn_forward.1} parent=0 // pred_check_branch
    %29 = sbr.rel (0) target = $region25
  $region24: #{funknn_forward.1} parent=0 // pred_region
    _
  $region25: #{funknn_forward.1} parent=0 // pred_fallthru
    _
  // Predicated region
  $region26: #{funknn_forward.1} parent=0 // pred_check
    _
  $region27: #{funknn_forward.1} parent=0 // pred_check_branch
    %31 = sbr.rel (0) target = $region29
  $region28: #{funknn_forward.1} parent=0 // pred_region
    _
  $region29: #{funknn_forward.1} parent=0 // pred_fallthru
    _
  // Predicated region
  $region30: #{funknn_forward.1} parent=0 // pred_check
    _
  $region31: #{funknn_forward.1} parent=0 // pred_check_branch
    %33 = sbr.rel (0) target = $region33
  $region32: #{funknn_forward.1} parent=0 // pred_region
    _
  $region33: #{funknn_forward.1} parent=0 // pred_fallthru
    _
  // Predicated region
  $region34: #{funknn_forward.1} parent=0 // pred_check
    _
  $region35: #{funknn_forward.1} parent=0 // pred_check_branch
    %35 = sbr.rel (0) target = $region37
  $region36: #{funknn_forward.1} parent=0 // pred_region
    _
  $region37: #{funknn_forward.1} parent=0 // pred_fallthru
    _
  // Predicated region
  $region38: #{funknn_forward.1} parent=0 // pred_check
    _
  $region39: #{funknn_forward.1} parent=0 // pred_check_branch
    %37 = sbr.rel (0) target = $region41
  $region40: #{funknn_forward.1} parent=0 // pred_region
    _
  $region41: #{funknn_forward.1} parent=0 // pred_fallthru
    _
  // Predicated region
  $region42: #{funknn_forward.1} parent=0 // pred_check
    _
  $region43: #{funknn_forward.1} parent=0 // pred_check_branch
    %39 = sbr.rel (0) target = $region45
  $region44: #{funknn_forward.1} parent=0 // pred_region
    _
  $region45: #{funknn_forward.1} parent=0 // pred_fallthru
    _
  // Predicated region
  $region46: #{funknn_forward.1} parent=0 // pred_check
    _
  $region47: #{funknn_forward.1} parent=0 // pred_check_branch
    %41 = sbr.rel (0) target = $region49
  $region48: #{funknn_forward.1} parent=0 // pred_region
    _
  $region49: #{funknn_forward.1} parent=0 // pred_fallthru
    _
  // Predicated region
  $region50: #{funknn_forward.1} parent=0 // pred_check
    _
  $region51: #{funknn_forward.1} parent=0 // pred_check_branch
    %43 = sbr.rel (0) target = $region53
  $region52: #{funknn_forward.1} parent=0 // pred_region
    _
  $region53: #{funknn_forward.1} parent=0 // pred_fallthru
    _
  %v45 = vld [vmem:[%s0] sm:$0xff]
  %v46 = vld [vmem:[%s0 + $0x8] sm:$0xff]
  %v47 = vld [vmem:[%s0 + $0x10] sm:$0xff]
  %v48 = vld [vmem:[%s0 + $0x18] sm:$0xff]
  %v49 = vld [vmem:[%s0 + $0x20] sm:$0xff]
  %v50 = vld [vmem:[%s0 + $0x28] sm:$0xff]
  %v51 = vpack.c.bf16 %v48, %v45
  %v52 = vpack.c.bf16 %v49, %v46
  %v53 = vpack.c.bf16 %v50, %v47
  %v54 = vld [vmem:[%s2] ss:$8 sm:$0xf]
  %v55 = vld [vmem:[%s3] sm:$0xff]
  %v56 = vld [vmem:[%s3 + $0x8] sm:$0xff]
  %v57 = vld [vmem:[%s3 + $0x10] sm:$0xff]
  %v58 = vld [vmem:[%s3 + $0x18] sm:$0xff]
  %v59 = vld [vmem:[%s3 + $0x20] sm:$0xff]
  %v60 = vld [vmem:[%s3 + $0x28] sm:$0xff]
  %v61 = vld [vmem:[%s3 + $0x30] sm:$0xff]
  %v62 = vld [vmem:[%s3 + $0x38] sm:$0xff]
  %v63 = vld [vmem:[%s3 + $0x40] sm:$0xff]
  %v64 = vld [vmem:[%s3 + $0x48] sm:$0xff]
  %v65 = vld [vmem:[%s3 + $0x50] sm:$0xff]
  %v66 = vld [vmem:[%s3 + $0x58] sm:$0xff]
  %v67 = vld [vmem:[%s3 + $0x60] sm:$0xff]
  %v68 = vld [vmem:[%s3 + $0x68] sm:$0xff]
  %v69 = vld [vmem:[%s3 + $0x70] sm:$0xff]
  %v70 = vld [vmem:[%s3 + $0x78] sm:$0xff]
  %v71 = vld [vmem:[%s3 + $0x80] sm:$0xff]
  %v72 = vld [vmem:[%s3 + $0x88] sm:$0xff]
  %v73 = vld [vmem:[%s3 + $0x90] sm:$0xff]
  %v74 = vld [vmem:[%s3 + $0x98] sm:$0xff]
  %v75 = vld [vmem:[%s3 + $0xa0] sm:$0xff]
  %v76 = vld [vmem:[%s3 + $0xa8] sm:$0xff]
  %v77 = vld [vmem:[%s3 + $0xb0] sm:$0xff]
  %v78 = vld [vmem:[%s3 + $0xb8] sm:$0xff]
  %v79 = vld [vmem:[%s3 + $0xc0] sm:$0xff]
  %v80 = vld [vmem:[%s3 + $0xc8] sm:$0xff]
  %v81 = vld [vmem:[%s3 + $0xd0] sm:$0xff]
  %v82 = vld [vmem:[%s3 + $0xd8] sm:$0xff]
  %v83 = vld [vmem:[%s3 + $0xe0] sm:$0xff]
  %v84 = vld [vmem:[%s3 + $0xe8] sm:$0xff]
  %v85 = vld [vmem:[%s3 + $0xf0] sm:$0xff]
  %v86 = vld [vmem:[%s3 + $0xf8] sm:$0xff]
  %v87 = vld [vmem:[%s3 + $0x100] sm:$0xff]
  %v88 = vld [vmem:[%s3 + $0x108] sm:$0xff]
  %v89 = vld [vmem:[%s3 + $0x110] sm:$0xff]
  %v90 = vld [vmem:[%s3 + $0x118] sm:$0xff]
  %v91 = vld [vmem:[%s3 + $0x120] sm:$0xff]
  %v92 = vld [vmem:[%s3 + $0x128] sm:$0xff]
  %v93 = vld [vmem:[%s3 + $0x130] sm:$0xff]
  %v94 = vld [vmem:[%s3 + $0x138] sm:$0xff]
  %v95 = vld [vmem:[%s3 + $0x140] sm:$0xff]
  %v96 = vld [vmem:[%s3 + $0x148] sm:$0xff]
  %v97 = vld [vmem:[%s3 + $0x150] sm:$0xff]
  %v98 = vld [vmem:[%s3 + $0x158] sm:$0xff]
  %v99 = vld [vmem:[%s3 + $0x160] sm:$0xff]
  %v100 = vld [vmem:[%s3 + $0x168] sm:$0xff]
  %v101 = vld [vmem:[%s3 + $0x170] sm:$0xff]
  %v102 = vld [vmem:[%s3 + $0x178] sm:$0xff]
  %v103 = vld [vmem:[%s3 + $0x180] sm:$0xff]
  %v104 = vld [vmem:[%s3 + $0x188] sm:$0xff]
  %v105 = vld [vmem:[%s3 + $0x190] sm:$0xff]
  %v106 = vld [vmem:[%s3 + $0x198] sm:$0xff]
  %v107 = vld [vmem:[%s3 + $0x1a0] sm:$0xff]
  %v108 = vld [vmem:[%s3 + $0x1a8] sm:$0xff]
  %v109 = vld [vmem:[%s3 + $0x1b0] sm:$0xff]
  %v110 = vld [vmem:[%s3 + $0x1b8] sm:$0xff]
  %v111 = vld [vmem:[%s3 + $0x1c0] sm:$0xff]
  %v112 = vld [vmem:[%s3 + $0x1c8] sm:$0xff]
  %v113 = vld [vmem:[%s3 + $0x1d0] sm:$0xff]
  %v114 = vld [vmem:[%s3 + $0x1d8] sm:$0xff]
  %v115 = vld [vmem:[%s3 + $0x1e0] sm:$0xff]
  %v116 = vld [vmem:[%s3 + $0x1e8] sm:$0xff]
  %v117 = vld [vmem:[%s3 + $0x1f0] sm:$0xff]
  %v118 = vld [vmem:[%s3 + $0x1f8] sm:$0xff]
  %v119 = vld [vmem:[%s3 + $0x200] sm:$0xff]
  %v120 = vld [vmem:[%s3 + $0x208] sm:$0xff]
  %v121 = vld [vmem:[%s3 + $0x210] sm:$0xff]
  %v122 = vld [vmem:[%s3 + $0x218] sm:$0xff]
  %v123 = vld [vmem:[%s3 + $0x220] sm:$0xff]
  %v124 = vld [vmem:[%s3 + $0x228] sm:$0xff]
  %v125 = vld [vmem:[%s3 + $0x230] sm:$0xff]
  %v126 = vld [vmem:[%s3 + $0x238] sm:$0xff]
  %v127 = vld [vmem:[%s3 + $0x240] sm:$0xff]
  %v128 = vld [vmem:[%s3 + $0x248] sm:$0xff]
  %v129 = vld [vmem:[%s3 + $0x250] sm:$0xff]
  %v130 = vld [vmem:[%s3 + $0x258] sm:$0xff]
  %v131 = vld [vmem:[%s3 + $0x260] sm:$0xff]
  %v132 = vld [vmem:[%s3 + $0x268] sm:$0xff]
  %v133 = vld [vmem:[%s3 + $0x270] sm:$0xff]
  %v134 = vld [vmem:[%s3 + $0x278] sm:$0xff]
  %v135 = vld [vmem:[%s3 + $0x280] sm:$0x33]
  %v136 = vld [vmem:[%s3 + $0x288] sm:$0x33]
  %v138 = vlaneseq
  %v139 = vshrl.u32 %v138, 7
  %v140 = vsub.s32 0, %v139
  %v141 = vrot.slane %v54, %v140
  %v142 = vlaneseq
  %v143 = vshrl.u32 %v142, 7
  %v144 = vsub.s32 1, %v143
  %v145 = vrot.slane %v54, %v144
  %v146 = vlaneseq
  %v147 = vshrl.u32 %v146, 7
  %v148 = vsub.s32 2, %v147
  %v149 = vrot.slane %v54, %v148
  %v150 = vlaneseq
  %v151 = vshrl.u32 %v150, 7
  %v152 = vsub.s32 3, %v151
  %v153 = vrot.slane %v54, %v152
  %v240 = vunpack.c.l.b16 %v55
  %v241 = vunpack.c.h.b16 %v55
  %v242 = vunpack.c.l.b16 %v56
  %v243 = vunpack.c.h.b16 %v56
  %v244 = vunpack.c.l.b16 %v57
  %v245 = vunpack.c.h.b16 %v57
  %v246 = vunpack.c.l.b16 %v58
  %v247 = vunpack.c.h.b16 %v58
  %v248 = vunpack.c.l.b16 %v59
  %v249 = vunpack.c.h.b16 %v59
  %v250 = vunpack.c.l.b16 %v60
  %v251 = vunpack.c.h.b16 %v60
  %v252 = vunpack.c.l.b16 %v61
  %v253 = vunpack.c.h.b16 %v61
  %v254 = vunpack.c.l.b16 %v62
  %v255 = vunpack.c.h.b16 %v62
  %v256 = vunpack.c.l.b16 %v63
  %v257 = vunpack.c.h.b16 %v63
  %v258 = vunpack.c.l.b16 %v64
  %v259 = vunpack.c.h.b16 %v64
  %v260 = vunpack.c.l.b16 %v65
  %v261 = vunpack.c.h.b16 %v65
  %v262 = vunpack.c.l.b16 %v66
  %v263 = vunpack.c.h.b16 %v66
  %v264 = vunpack.c.l.b16 %v67
  %v265 = vunpack.c.h.b16 %v67
  %v266 = vunpack.c.l.b16 %v68
  %v267 = vunpack.c.h.b16 %v68
  %v268 = vunpack.c.l.b16 %v69
  %v269 = vunpack.c.h.b16 %v69
  %v270 = vunpack.c.l.b16 %v70
  %v271 = vunpack.c.h.b16 %v70
  %v272 = vunpack.c.l.b16 %v71
  %v273 = vunpack.c.h.b16 %v71
  %v274 = vunpack.c.l.b16 %v72
  %v275 = vunpack.c.h.b16 %v72
  %v276 = vunpack.c.l.b16 %v73
  %v277 = vunpack.c.h.b16 %v73
  %v278 = vunpack.c.l.b16 %v74
  %v279 = vunpack.c.h.b16 %v74
  %v280 = vunpack.c.l.b16 %v75
  %v281 = vunpack.c.h.b16 %v75
  %v282 = vunpack.c.l.b16 %v76
  %v283 = vunpack.c.h.b16 %v76
  %v284 = vunpack.c.l.b16 %v77
  %v285 = vunpack.c.h.b16 %v77
  %v286 = vunpack.c.l.b16 %v78
  %v287 = vunpack.c.h.b16 %v78
  %v288 = vunpack.c.l.b16 %v79
  %v289 = vunpack.c.h.b16 %v79
  %v290 = vunpack.c.l.b16 %v80
  %v291 = vunpack.c.h.b16 %v80
  %v292 = vunpack.c.l.b16 %v81
  %v293 = vunpack.c.h.b16 %v81
  %v294 = vunpack.c.l.b16 %v82
  %v295 = vunpack.c.h.b16 %v82
  %v296 = vunpack.c.l.b16 %v83
  %v297 = vunpack.c.h.b16 %v83
  %v298 = vunpack.c.l.b16 %v84
  %v299 = vunpack.c.h.b16 %v84
  %v300 = vunpack.c.l.b16 %v85
  %v301 = vunpack.c.h.b16 %v85
  %v302 = vunpack.c.l.b16 %v86
  %v303 = vunpack.c.h.b16 %v86
  %v304 = vunpack.c.l.b16 %v87
  %v305 = vunpack.c.h.b16 %v87
  %v306 = vunpack.c.l.b16 %v88
  %v307 = vunpack.c.h.b16 %v88
  %v308 = vunpack.c.l.b16 %v89
  %v309 = vunpack.c.h.b16 %v89
  %v310 = vunpack.c.l.b16 %v90
  %v311 = vunpack.c.h.b16 %v90
  %v312 = vunpack.c.l.b16 %v91
  %v313 = vunpack.c.h.b16 %v91
  %v314 = vunpack.c.l.b16 %v92
  %v315 = vunpack.c.h.b16 %v92
  %v316 = vunpack.c.l.b16 %v93
  %v317 = vunpack.c.h.b16 %v93
  %v318 = vunpack.c.l.b16 %v94
  %v319 = vunpack.c.h.b16 %v94
  %v320 = vunpack.c.l.b16 %v95
  %v321 = vunpack.c.h.b16 %v95
  %v322 = vunpack.c.l.b16 %v96
  %v323 = vunpack.c.h.b16 %v96
  %v324 = vunpack.c.l.b16 %v97
  %v325 = vunpack.c.h.b16 %v97
  %v326 = vunpack.c.l.b16 %v98
  %v327 = vunpack.c.h.b16 %v98
  %v328 = vunpack.c.l.b16 %v99
  %v329 = vunpack.c.h.b16 %v99
  %v330 = vunpack.c.l.b16 %v100
  %v331 = vunpack.c.h.b16 %v100
  %v332 = vunpack.c.l.b16 %v101
  %v333 = vunpack.c.h.b16 %v101
  %v334 = vunpack.c.l.b16 %v102
  %v335 = vunpack.c.h.b16 %v102
  %v336 = vunpack.c.l.b16 %v103
  %v337 = vunpack.c.h.b16 %v103
  %v338 = vunpack.c.l.b16 %v104
  %v339 = vunpack.c.h.b16 %v104
  %v340 = vunpack.c.l.b16 %v105
  %v341 = vunpack.c.h.b16 %v105
  %v342 = vunpack.c.l.b16 %v106
  %v343 = vunpack.c.h.b16 %v106
  %v344 = vunpack.c.l.b16 %v107
  %v345 = vunpack.c.h.b16 %v107
  %v346 = vunpack.c.l.b16 %v108
  %v347 = vunpack.c.h.b16 %v108
  %v348 = vunpack.c.l.b16 %v109
  %v349 = vunpack.c.h.b16 %v109
  %v350 = vunpack.c.l.b16 %v110
  %v351 = vunpack.c.h.b16 %v110
  %v352 = vunpack.c.l.b16 %v111
  %v353 = vunpack.c.h.b16 %v111
  %v354 = vunpack.c.l.b16 %v112
  %v355 = vunpack.c.h.b16 %v112
  %v356 = vunpack.c.l.b16 %v113
  %v357 = vunpack.c.h.b16 %v113
  %v358 = vunpack.c.l.b16 %v114
  %v359 = vunpack.c.h.b16 %v114
  %v360 = vunpack.c.l.b16 %v115
  %v361 = vunpack.c.h.b16 %v115
  %v362 = vunpack.c.l.b16 %v116
  %v363 = vunpack.c.h.b16 %v116
  %v364 = vunpack.c.l.b16 %v117
  %v365 = vunpack.c.h.b16 %v117
  %v366 = vunpack.c.l.b16 %v118
  %v367 = vunpack.c.h.b16 %v118
  %v368 = vunpack.c.l.b16 %v119
  %v369 = vunpack.c.h.b16 %v119
  %v370 = vunpack.c.l.b16 %v120
  %v371 = vunpack.c.h.b16 %v120
  %v372 = vunpack.c.l.b16 %v121
  %v373 = vunpack.c.h.b16 %v121
  %v374 = vunpack.c.l.b16 %v122
  %v375 = vunpack.c.h.b16 %v122
  %v376 = vunpack.c.l.b16 %v123
  %v377 = vunpack.c.h.b16 %v123
  %v378 = vunpack.c.l.b16 %v124
  %v379 = vunpack.c.h.b16 %v124
  %v380 = vunpack.c.l.b16 %v125
  %v381 = vunpack.c.h.b16 %v125
  %v382 = vunpack.c.l.b16 %v126
  %v383 = vunpack.c.h.b16 %v126
  %v384 = vunpack.c.l.b16 %v127
  %v385 = vunpack.c.h.b16 %v127
  %v386 = vunpack.c.l.b16 %v128
  %v387 = vunpack.c.h.b16 %v128
  %v388 = vunpack.c.l.b16 %v129
  %v389 = vunpack.c.h.b16 %v129
  %v390 = vunpack.c.l.b16 %v130
  %v391 = vunpack.c.h.b16 %v130
  %v392 = vunpack.c.l.b16 %v131
  %v393 = vunpack.c.h.b16 %v131
  %v394 = vunpack.c.l.b16 %v132
  %v395 = vunpack.c.h.b16 %v132
  %v396 = vunpack.c.l.b16 %v133
  %v397 = vunpack.c.h.b16 %v133
  %v398 = vunpack.c.l.b16 %v134
  %v399 = vunpack.c.h.b16 %v134
  %v400 = vunpack.c.l.b16 %v135
  %v401 = vunpack.c.h.b16 %v135
  %v402 = vunpack.c.l.b16 %v136
  %v403 = vunpack.c.h.b16 %v136
  %v404 = vpack.c.b16 %v244, %v240
  %v405 = vpack.c.b16 %v245, %v241
  %v406 = vpack.c.b16 %v246, %v242
  %v407 = vpack.c.b16 %v247, %v243
  %v408 = vpack.c.b16 %v252, %v248
  %v409 = vpack.c.b16 %v253, %v249
  %v410 = vpack.c.b16 %v254, %v250
  %v411 = vpack.c.b16 %v255, %v251
  %v412 = vpack.c.b16 %v260, %v256
  %v413 = vpack.c.b16 %v261, %v257
  %v414 = vpack.c.b16 %v262, %v258
  %v415 = vpack.c.b16 %v263, %v259
  %v416 = vpack.c.b16 %v268, %v264
  %v417 = vpack.c.b16 %v269, %v265
  %v418 = vpack.c.b16 %v270, %v266
  %v419 = vpack.c.b16 %v271, %v267
  %v420 = vpack.c.b16 %v276, %v272
  %v421 = vpack.c.b16 %v277, %v273
  %v422 = vpack.c.b16 %v278, %v274
  %v423 = vpack.c.b16 %v279, %v275
  %v424 = vpack.c.b16 %v284, %v280
  %v425 = vpack.c.b16 %v285, %v281
  %v426 = vpack.c.b16 %v286, %v282
  %v427 = vpack.c.b16 %v287, %v283
  %v428 = vpack.c.b16 %v292, %v288
  %v429 = vpack.c.b16 %v293, %v289
  %v430 = vpack.c.b16 %v294, %v290
  %v431 = vpack.c.b16 %v295, %v291
  %v432 = vpack.c.b16 %v300, %v296
  %v433 = vpack.c.b16 %v301, %v297
  %v434 = vpack.c.b16 %v302, %v298
  %v435 = vpack.c.b16 %v303, %v299
  %v436 = vpack.c.b16 %v308, %v304
  %v437 = vpack.c.b16 %v309, %v305
  %v438 = vpack.c.b16 %v310, %v306
  %v439 = vpack.c.b16 %v311, %v307
  %v440 = vpack.c.b16 %v316, %v312
  %v441 = vpack.c.b16 %v317, %v313
  %v442 = vpack.c.b16 %v318, %v314
  %v443 = vpack.c.b16 %v319, %v315
  %v444 = vpack.c.b16 %v324, %v320
  %v445 = vpack.c.b16 %v325, %v321
  %v446 = vpack.c.b16 %v326, %v322
  %v447 = vpack.c.b16 %v327, %v323
  %v448 = vpack.c.b16 %v332, %v328
  %v449 = vpack.c.b16 %v333, %v329
  %v450 = vpack.c.b16 %v334, %v330
  %v451 = vpack.c.b16 %v335, %v331
  %v452 = vpack.c.b16 %v340, %v336
  %v453 = vpack.c.b16 %v341, %v337
  %v454 = vpack.c.b16 %v342, %v338
  %v455 = vpack.c.b16 %v343, %v339
  %v456 = vpack.c.b16 %v348, %v344
  %v457 = vpack.c.b16 %v349, %v345
  %v458 = vpack.c.b16 %v350, %v346
  %v459 = vpack.c.b16 %v351, %v347
  %v460 = vpack.c.b16 %v356, %v352
  %v461 = vpack.c.b16 %v357, %v353
  %v462 = vpack.c.b16 %v358, %v354
  %v463 = vpack.c.b16 %v359, %v355
  %v464 = vpack.c.b16 %v364, %v360
  %v465 = vpack.c.b16 %v365, %v361
  %v466 = vpack.c.b16 %v366, %v362
  %v467 = vpack.c.b16 %v367, %v363
  %v468 = vpack.c.b16 %v372, %v368
  %v469 = vpack.c.b16 %v373, %v369
  %v470 = vpack.c.b16 %v374, %v370
  %v471 = vpack.c.b16 %v375, %v371
  %v472 = vpack.c.b16 %v380, %v376
  %v473 = vpack.c.b16 %v381, %v377
  %v474 = vpack.c.b16 %v382, %v378
  %v475 = vpack.c.b16 %v383, %v379
  %v476 = vpack.c.b16 %v388, %v384
  %v477 = vpack.c.b16 %v389, %v385
  %v478 = vpack.c.b16 %v390, %v386
  %v479 = vpack.c.b16 %v391, %v387
  %v480 = vpack.c.b16 %v396, %v392
  %v481 = vpack.c.b16 %v397, %v393
  %v482 = vpack.c.b16 %v398, %v394
  %v483 = vpack.c.b16 %v399, %v395
  %v484 = vpack.c.b16 %v400, %v400
  %v485 = vpack.c.b16 %v401, %v401
  %v486 = vpack.c.b16 %v402, %v402
  %v487 = vpack.c.b16 %v403, %v403
  %vm568 = vcmask 556032
  %v570 = vsel %vm568, %v53, 0
  %vm572 = vcmask 1041408
  %v574 = vsel %vm572, %v484, 0
  %v577 = vsel %vm572, %v485, 0
  %v580 = vsel %vm572, %v486, 0
  %v583 = vsel %vm572, %v487, 0
  %585 = vmatprep.subr.bf16.mxu0 %v405
  %586 = vmatpush1.bf16.msra.mxu0 %v404
  %587 = vmatprep.subr.bf16.mxu0 %v409
  %588 = vmatpush1.bf16.msra.mxu0 %v408
  %589 = vmatprep.subr.bf16.mxu0 %v413
  %590 = vmatpush1.bf16.msra.mxu0 %v412
  %591 = vmatprep.subr.bf16.mxu0 %v417
  %592 = vmatpush1.bf16.msra.mxu0 %v416
  %593 = vmatprep.subr.bf16.mxu0 %v421
  %594 = vmatpush1.bf16.msra.mxu0 %v420
  %595 = vmatprep.subr.bf16.mxu0 %v425
  %596 = vmatpush1.bf16.msra.mxu0 %v424
  %597 = vmatprep.subr.bf16.mxu0 %v429
  %598 = vmatpush1.bf16.msra.mxu0 %v428
  %599 = vmatprep.subr.bf16.mxu0 %v433
  %600 = vmatpush1.bf16.msra.mxu0 %v432
  %601 = vmatprep.subr.bf16.mxu0 %v437
  %602 = vmatpush1.bf16.msra.mxu0 %v436
  %603 = vmatprep.subr.bf16.mxu0 %v441
  %604 = vmatpush1.bf16.msra.mxu0 %v440
  %605 = vmatprep.subr.bf16.mxu0 %v445
  %606 = vmatpush1.bf16.msra.mxu0 %v444
  %607 = vmatprep.subr.bf16.mxu0 %v449
  %608 = vmatpush1.bf16.msra.mxu0 %v448
  %609 = vmatprep.subr.bf16.mxu0 %v453
  %610 = vmatpush1.bf16.msra.mxu0 %v452
  %611 = vmatprep.subr.bf16.mxu0 %v457
  %612 = vmatpush1.bf16.msra.mxu0 %v456
  %613 = vmatprep.subr.bf16.mxu0 %v461
  %614 = vmatpush1.bf16.msra.mxu0 %v460
  %615 = vmatprep.subr.bf16.mxu0 %v465
  %616 = vmatpush1.bf16.msra.mxu0 %v464
  %617 = vmatprep.mubr.bf16.mxu0 %v52
  %618 = vmatmul.mubr.bf16.gmra.mrb[0].mxu0 %v51
  %v619 = vpop.f32.mrb[0].mxu0
  %v620 = vadd.f32 %v141, %v619
  %v621 = vpop.f32.mrb[0].mxu0
  %v622 = vadd.f32 %v145, %v621
  %v623 = vpop.f32.mrb[0].mxu0
  %v624 = vadd.f32 %v141, %v623
  %v625 = vpop.f32.mrb[0].mxu0
  %v626 = vadd.f32 %v145, %v625
  %627 = vdwg.mxu0
  %628 = vmatprep.subr.bf16.mxu0 %v469
  %629 = vmatpush1.bf16.msra.mxu0 %v468
  %630 = vmatprep.subr.bf16.mxu0 %v473
  %631 = vmatpush1.bf16.msra.mxu0 %v472
  %632 = vmatprep.subr.bf16.mxu0 %v477
  %633 = vmatpush1.bf16.msra.mxu0 %v476
  %634 = vmatprep.subr.bf16.mxu0 %v481
  %635 = vmatpush1.bf16.msra.mxu0 %v480
  %636 = vmatprep.subr.bf16.mxu0 %v577
  %637 = vmatpush1.bf16.msra.mxu0 %v574
  %638 = vmatprep.subr.bf16.mxu0 0
  %639 = vmatpush1.bf16.msra.mxu0 0
  %640 = vmatprep.subr.bf16.mxu0 0
  %641 = vmatpush1.bf16.msra.mxu0 0
  %642 = vmatprep.subr.bf16.mxu0 0
  %643 = vmatpush1.bf16.msra.mxu0 0
  %644 = vmatprep.subr.bf16.mxu0 0
  %645 = vmatpush1.bf16.msra.mxu0 0
  %646 = vmatprep.subr.bf16.mxu0 0
  %647 = vmatpush1.bf16.msra.mxu0 0
  %648 = vmatprep.subr.bf16.mxu0 0
  %649 = vmatpush1.bf16.msra.mxu0 0
  %650 = vmatprep.subr.bf16.mxu0 0
  %651 = vmatpush1.bf16.msra.mxu0 0
  %652 = vmatprep.subr.bf16.mxu0 0
  %653 = vmatpush1.bf16.msra.mxu0 0
  %654 = vmatprep.subr.bf16.mxu0 0
  %655 = vmatpush1.bf16.msra.mxu0 0
  %656 = vmatprep.subr.bf16.mxu0 0
  %657 = vmatpush1.bf16.msra.mxu0 0
  %658 = vmatprep.subr.bf16.mxu0 0
  %659 = vmatpush1.bf16.msra.mxu0 0
  %660 = vmatprep.mubr.bf16.mxu0 0
  %661 = vmatmul.mubr.bf16.gmra.mrb[0].mxu0 %v570
  %v662 = vpop.f32.mrb[0].mxu0
  %v663 = vadd.f32 %v620, %v662
  %v664 = vpop.f32.mrb[0].mxu0
  %v665 = vadd.f32 %v622, %v664
  %v666 = vpop.f32.mrb[0].mxu0
  %v667 = vadd.f32 %v624, %v666
  %v668 = vpop.f32.mrb[0].mxu0
  %v669 = vadd.f32 %v626, %v668
  %670 = vdwg.mxu0
  %671 = vmatprep.subr.bf16.mxu0 %v407
  %672 = vmatpush1.bf16.msra.mxu0 %v406
  %673 = vmatprep.subr.bf16.mxu0 %v411
  %674 = vmatpush1.bf16.msra.mxu0 %v410
  %675 = vmatprep.subr.bf16.mxu0 %v415
  %676 = vmatpush1.bf16.msra.mxu0 %v414
  %677 = vmatprep.subr.bf16.mxu0 %v419
  %678 = vmatpush1.bf16.msra.mxu0 %v418
  %679 = vmatprep.subr.bf16.mxu0 %v423
  %680 = vmatpush1.bf16.msra.mxu0 %v422
  %681 = vmatprep.subr.bf16.mxu0 %v427
  %682 = vmatpush1.bf16.msra.mxu0 %v426
  %683 = vmatprep.subr.bf16.mxu0 %v431
  %684 = vmatpush1.bf16.msra.mxu0 %v430
  %685 = vmatprep.subr.bf16.mxu0 %v435
  %686 = vmatpush1.bf16.msra.mxu0 %v434
  %687 = vmatprep.subr.bf16.mxu0 %v439
  %688 = vmatpush1.bf16.msra.mxu0 %v438
  %689 = vmatprep.subr.bf16.mxu0 %v443
  %690 = vmatpush1.bf16.msra.mxu0 %v442
  %691 = vmatprep.subr.bf16.mxu0 %v447
  %692 = vmatpush1.bf16.msra.mxu0 %v446
  %693 = vmatprep.subr.bf16.mxu0 %v451
  %694 = vmatpush1.bf16.msra.mxu0 %v450
  %695 = vmatprep.subr.bf16.mxu0 %v455
  %696 = vmatpush1.bf16.msra.mxu0 %v454
  %697 = vmatprep.subr.bf16.mxu0 %v459
  %698 = vmatpush1.bf16.msra.mxu0 %v458
  %699 = vmatprep.subr.bf16.mxu0 %v463
  %700 = vmatpush1.bf16.msra.mxu0 %v462
  %701 = vmatprep.subr.bf16.mxu0 %v467
  %702 = vmatpush1.bf16.msra.mxu0 %v466
  %703 = vmatprep.mubr.bf16.mxu0 %v52
  %704 = vmatmul.mubr.bf16.gmra.mrb[0].mxu0 %v51
  %v705 = vpop.f32.mrb[0].mxu0
  %v706 = vadd.f32 %v149, %v705
  %v707 = vpop.f32.mrb[0].mxu0
  %v708 = vadd.f32 %v153, %v707
  %v709 = vpop.f32.mrb[0].mxu0
  %v710 = vadd.f32 %v149, %v709
  %v711 = vpop.f32.mrb[0].mxu0
  %v712 = vadd.f32 %v153, %v711
  %713 = vdwg.mxu0
  %714 = vmatprep.subr.bf16.mxu0 %v471
  %715 = vmatpush1.bf16.msra.mxu0 %v470
  %716 = vmatprep.subr.bf16.mxu0 %v475
  %717 = vmatpush1.bf16.msra.mxu0 %v474
  %718 = vmatprep.subr.bf16.mxu0 %v479
  %719 = vmatpush1.bf16.msra.mxu0 %v478
  %720 = vmatprep.subr.bf16.mxu0 %v483
  %721 = vmatpush1.bf16.msra.mxu0 %v482
  %722 = vmatprep.subr.bf16.mxu0 %v583
  %723 = vmatpush1.bf16.msra.mxu0 %v580
  %724 = vmatprep.subr.bf16.mxu0 0
  %725 = vmatpush1.bf16.msra.mxu0 0
  %726 = vmatprep.subr.bf16.mxu0 0
  %727 = vmatpush1.bf16.msra.mxu0 0
  %728 = vmatprep.subr.bf16.mxu0 0
  %729 = vmatpush1.bf16.msra.mxu0 0
  %730 = vmatprep.subr.bf16.mxu0 0
  %731 = vmatpush1.bf16.msra.mxu0 0
  %732 = vmatprep.subr.bf16.mxu0 0
  %733 = vmatpush1.bf16.msra.mxu0 0
  %734 = vmatprep.subr.bf16.mxu0 0
  %735 = vmatpush1.bf16.msra.mxu0 0
  %736 = vmatprep.subr.bf16.mxu0 0
  %737 = vmatpush1.bf16.msra.mxu0 0
  %738 = vmatprep.subr.bf16.mxu0 0
  %739 = vmatpush1.bf16.msra.mxu0 0
  %740 = vmatprep.subr.bf16.mxu0 0
  %741 = vmatpush1.bf16.msra.mxu0 0
  %742 = vmatprep.subr.bf16.mxu0 0
  %743 = vmatpush1.bf16.msra.mxu0 0
  %744 = vmatprep.subr.bf16.mxu0 0
  %745 = vmatpush1.bf16.msra.mxu0 0
  %746 = vmatprep.mubr.bf16.mxu0 0
  %747 = vmatmul.mubr.bf16.gmra.mrb[0].mxu0 %v570
  %v748 = vpop.f32.mrb[0].mxu0
  %v749 = vadd.f32 %v706, %v748
  %v750 = vpop.f32.mrb[0].mxu0
  %v751 = vadd.f32 %v708, %v750
  %v752 = vpop.f32.mrb[0].mxu0
  %v753 = vadd.f32 %v710, %v752
  %v754 = vpop.f32.mrb[0].mxu0
  %v755 = vadd.f32 %v712, %v754
  %756 = vdwg.mxu0
  %v757 = vmax.f32 %v663, 0.0
  %v758 = vmax.f32 %v665, 0.0
  %v759 = vmax.f32 %v749, 0.0
  %v760 = vmax.f32 %v751, 0.0
  %v761 = vmax.f32 %v667, 0.0
  %v762 = vmax.f32 %v669, 0.0
  %v763 = vmax.f32 %v753, 0.0
  %v764 = vmax.f32 %v755, 0.0
  %v765 = vpack.c.bf16 %v761, %v757
  %v766 = vpack.c.bf16 %v762, %v758
  %v767 = vpack.c.bf16 %v763, %v759
  %v768 = vpack.c.bf16 %v764, %v760
  %s769 = scalar_lea.vmem %s2, 1
  %v770 = vld [vmem:[%s769] ss:$8 sm:$0xf]
  %v771 = vld [vmem:[%s4] sm:$0xff]
  %v772 = vld [vmem:[%s4 + $0x8] sm:$0xff]
  %v773 = vld [vmem:[%s4 + $0x10] sm:$0xff]
  %v774 = vld [vmem:[%s4 + $0x18] sm:$0xff]
  %v775 = vld [vmem:[%s4 + $0x20] sm:$0xff]
  %v776 = vld [vmem:[%s4 + $0x28] sm:$0xff]
  %v777 = vld [vmem:[%s4 + $0x30] sm:$0xff]
  %v778 = vld [vmem:[%s4 + $0x38] sm:$0xff]
  %v779 = vld [vmem:[%s4 + $0x40] sm:$0xff]
  %v780 = vld [vmem:[%s4 + $0x48] sm:$0xff]
  %v781 = vld [vmem:[%s4 + $0x50] sm:$0xff]
  %v782 = vld [vmem:[%s4 + $0x58] sm:$0xff]
  %v783 = vld [vmem:[%s4 + $0x60] sm:$0xff]
  %v784 = vld [vmem:[%s4 + $0x68] sm:$0xff]
  %v785 = vld [vmem:[%s4 + $0x70] sm:$0xff]
  %v786 = vld [vmem:[%s4 + $0x78] sm:$0xff]
  %v787 = vld [vmem:[%s4 + $0x80] sm:$0xff]
  %v788 = vld [vmem:[%s4 + $0x88] sm:$0xff]
  %v789 = vld [vmem:[%s4 + $0x90] sm:$0xff]
  %v790 = vld [vmem:[%s4 + $0x98] sm:$0xff]
  %v791 = vld [vmem:[%s4 + $0xa0] sm:$0xff]
  %v792 = vld [vmem:[%s4 + $0xa8] sm:$0xff]
  %v793 = vld [vmem:[%s4 + $0xb0] sm:$0xff]
  %v794 = vld [vmem:[%s4 + $0xb8] sm:$0xff]
  %v795 = vld [vmem:[%s4 + $0xc0] sm:$0xff]
  %v796 = vld [vmem:[%s4 + $0xc8] sm:$0xff]
  %v797 = vld [vmem:[%s4 + $0xd0] sm:$0xff]
  %v798 = vld [vmem:[%s4 + $0xd8] sm:$0xff]
  %v799 = vld [vmem:[%s4 + $0xe0] sm:$0xff]
  %v800 = vld [vmem:[%s4 + $0xe8] sm:$0xff]
  %v801 = vld [vmem:[%s4 + $0xf0] sm:$0xff]
  %v802 = vld [vmem:[%s4 + $0xf8] sm:$0xff]
  %v803 = vld [vmem:[%s4 + $0x100] sm:$0xff]
  %v804 = vld [vmem:[%s4 + $0x108] sm:$0xff]
  %v805 = vld [vmem:[%s4 + $0x110] sm:$0xff]
  %v806 = vld [vmem:[%s4 + $0x118] sm:$0xff]
  %v807 = vld [vmem:[%s4 + $0x120] sm:$0xff]
  %v808 = vld [vmem:[%s4 + $0x128] sm:$0xff]
  %v809 = vld [vmem:[%s4 + $0x130] sm:$0xff]
  %v810 = vld [vmem:[%s4 + $0x138] sm:$0xff]
  %v811 = vld [vmem:[%s4 + $0x140] sm:$0xff]
  %v812 = vld [vmem:[%s4 + $0x148] sm:$0xff]
  %v813 = vld [vmem:[%s4 + $0x150] sm:$0xff]
  %v814 = vld [vmem:[%s4 + $0x158] sm:$0xff]
  %v815 = vld [vmem:[%s4 + $0x160] sm:$0xff]
  %v816 = vld [vmem:[%s4 + $0x168] sm:$0xff]
  %v817 = vld [vmem:[%s4 + $0x170] sm:$0xff]
  %v818 = vld [vmem:[%s4 + $0x178] sm:$0xff]
  %v819 = vld [vmem:[%s4 + $0x180] sm:$0xff]
  %v820 = vld [vmem:[%s4 + $0x188] sm:$0xff]
  %v821 = vld [vmem:[%s4 + $0x190] sm:$0xff]
  %v822 = vld [vmem:[%s4 + $0x198] sm:$0xff]
  %v823 = vld [vmem:[%s4 + $0x1a0] sm:$0xff]
  %v824 = vld [vmem:[%s4 + $0x1a8] sm:$0xff]
  %v825 = vld [vmem:[%s4 + $0x1b0] sm:$0xff]
  %v826 = vld [vmem:[%s4 + $0x1b8] sm:$0xff]
  %v827 = vld [vmem:[%s4 + $0x1c0] sm:$0xff]
  %v828 = vld [vmem:[%s4 + $0x1c8] sm:$0xff]
  %v829 = vld [vmem:[%s4 + $0x1d0] sm:$0xff]
  %v830 = vld [vmem:[%s4 + $0x1d8] sm:$0xff]
  %v831 = vld [vmem:[%s4 + $0x1e0] sm:$0xff]
  %v832 = vld [vmem:[%s4 + $0x1e8] sm:$0xff]
  %v833 = vld [vmem:[%s4 + $0x1f0] sm:$0xff]
  %v834 = vld [vmem:[%s4 + $0x1f8] sm:$0xff]
  %v835 = vld [vmem:[%s4 + $0x200] sm:$0xff]
  %v836 = vld [vmem:[%s4 + $0x208] sm:$0xff]
  %v837 = vld [vmem:[%s4 + $0x210] sm:$0xff]
  %v838 = vld [vmem:[%s4 + $0x218] sm:$0xff]
  %v839 = vld [vmem:[%s4 + $0x220] sm:$0xff]
  %v840 = vld [vmem:[%s4 + $0x228] sm:$0xff]
  %v841 = vld [vmem:[%s4 + $0x230] sm:$0xff]
  %v842 = vld [vmem:[%s4 + $0x238] sm:$0xff]
  %v843 = vld [vmem:[%s4 + $0x240] sm:$0xff]
  %v844 = vld [vmem:[%s4 + $0x248] sm:$0xff]
  %v845 = vld [vmem:[%s4 + $0x250] sm:$0xff]
  %v846 = vld [vmem:[%s4 + $0x258] sm:$0xff]
  %v847 = vld [vmem:[%s4 + $0x260] sm:$0xff]
  %v848 = vld [vmem:[%s4 + $0x268] sm:$0xff]
  %v849 = vld [vmem:[%s4 + $0x270] sm:$0xff]
  %v850 = vld [vmem:[%s4 + $0x278] sm:$0xff]
  %v851 = vld [vmem:[%s4 + $0x280] sm:$0xff]
  %v852 = vld [vmem:[%s4 + $0x288] sm:$0xff]
  %v853 = vld [vmem:[%s4 + $0x290] sm:$0xff]
  %v854 = vld [vmem:[%s4 + $0x298] sm:$0xff]
  %v855 = vld [vmem:[%s4 + $0x2a0] sm:$0xff]
  %v856 = vld [vmem:[%s4 + $0x2a8] sm:$0xff]
  %v857 = vld [vmem:[%s4 + $0x2b0] sm:$0xff]
  %v858 = vld [vmem:[%s4 + $0x2b8] sm:$0xff]
  %v859 = vld [vmem:[%s4 + $0x2c0] sm:$0xff]
  %v860 = vld [vmem:[%s4 + $0x2c8] sm:$0xff]
  %v861 = vld [vmem:[%s4 + $0x2d0] sm:$0xff]
  %v862 = vld [vmem:[%s4 + $0x2d8] sm:$0xff]
  %v863 = vld [vmem:[%s4 + $0x2e0] sm:$0xff]
  %v864 = vld [vmem:[%s4 + $0x2e8] sm:$0xff]
  %v865 = vld [vmem:[%s4 + $0x2f0] sm:$0xff]
  %v866 = vld [vmem:[%s4 + $0x2f8] sm:$0xff]
  %v867 = vld [vmem:[%s4 + $0x300] sm:$0xff]
  %v868 = vld [vmem:[%s4 + $0x308] sm:$0xff]
  %v869 = vld [vmem:[%s4 + $0x310] sm:$0xff]
  %v870 = vld [vmem:[%s4 + $0x318] sm:$0xff]
  %v871 = vld [vmem:[%s4 + $0x320] sm:$0xff]
  %v872 = vld [vmem:[%s4 + $0x328] sm:$0xff]
  %v873 = vld [vmem:[%s4 + $0x330] sm:$0xff]
  %v874 = vld [vmem:[%s4 + $0x338] sm:$0xff]
  %v875 = vld [vmem:[%s4 + $0x340] sm:$0xff]
  %v876 = vld [vmem:[%s4 + $0x348] sm:$0xff]
  %v877 = vld [vmem:[%s4 + $0x350] sm:$0xff]
  %v878 = vld [vmem:[%s4 + $0x358] sm:$0xff]
  %v879 = vld [vmem:[%s4 + $0x360] sm:$0xff]
  %v880 = vld [vmem:[%s4 + $0x368] sm:$0xff]
  %v881 = vld [vmem:[%s4 + $0x370] sm:$0xff]
  %v882 = vld [vmem:[%s4 + $0x378] sm:$0xff]
  %v883 = vld [vmem:[%s4 + $0x380] sm:$0xff]
  %v884 = vld [vmem:[%s4 + $0x388] sm:$0xff]
  %v885 = vld [vmem:[%s4 + $0x390] sm:$0xff]
  %v886 = vld [vmem:[%s4 + $0x398] sm:$0xff]
  %v887 = vld [vmem:[%s4 + $0x3a0] sm:$0xff]
  %v888 = vld [vmem:[%s4 + $0x3a8] sm:$0xff]
  %v889 = vld [vmem:[%s4 + $0x3b0] sm:$0xff]
  %v890 = vld [vmem:[%s4 + $0x3b8] sm:$0xff]
  %v891 = vld [vmem:[%s4 + $0x3c0] sm:$0xff]
  %v892 = vld [vmem:[%s4 + $0x3c8] sm:$0xff]
  %v893 = vld [vmem:[%s4 + $0x3d0] sm:$0xff]
  %v894 = vld [vmem:[%s4 + $0x3d8] sm:$0xff]
  %v895 = vld [vmem:[%s4 + $0x3e0] sm:$0xff]
  %v896 = vld [vmem:[%s4 + $0x3e8] sm:$0xff]
  %v897 = vld [vmem:[%s4 + $0x3f0] sm:$0xff]
  %v898 = vld [vmem:[%s4 + $0x3f8] sm:$0xff]
  %v900 = vlaneseq
  %v901 = vshrl.u32 %v900, 7
  %v902 = vsub.s32 0, %v901
  %v903 = vrot.slane %v770, %v902
  %v904 = vlaneseq
  %v905 = vshrl.u32 %v904, 7
  %v906 = vsub.s32 1, %v905
  %v907 = vrot.slane %v770, %v906
  %v908 = vlaneseq
  %v909 = vshrl.u32 %v908, 7
  %v910 = vsub.s32 2, %v909
  %v911 = vrot.slane %v770, %v910
  %v912 = vlaneseq
  %v913 = vshrl.u32 %v912, 7
  %v914 = vsub.s32 3, %v913
  %v915 = vrot.slane %v770, %v914
  %v1048 = vunpack.c.l.b16 %v771
  %v1049 = vunpack.c.h.b16 %v771
  %v1050 = vunpack.c.l.b16 %v772
  %v1051 = vunpack.c.h.b16 %v772
  %v1052 = vunpack.c.l.b16 %v773
  %v1053 = vunpack.c.h.b16 %v773
  %v1054 = vunpack.c.l.b16 %v774
  %v1055 = vunpack.c.h.b16 %v774
  %v1056 = vunpack.c.l.b16 %v775
  %v1057 = vunpack.c.h.b16 %v775
  %v1058 = vunpack.c.l.b16 %v776
  %v1059 = vunpack.c.h.b16 %v776
  %v1060 = vunpack.c.l.b16 %v777
  %v1061 = vunpack.c.h.b16 %v777
  %v1062 = vunpack.c.l.b16 %v778
  %v1063 = vunpack.c.h.b16 %v778
  %v1064 = vunpack.c.l.b16 %v779
  %v1065 = vunpack.c.h.b16 %v779
  %v1066 = vunpack.c.l.b16 %v780
  %v1067 = vunpack.c.h.b16 %v780
  %v1068 = vunpack.c.l.b16 %v781
  %v1069 = vunpack.c.h.b16 %v781
  %v1070 = vunpack.c.l.b16 %v782
  %v1071 = vunpack.c.h.b16 %v782
  %v1072 = vunpack.c.l.b16 %v783
  %v1073 = vunpack.c.h.b16 %v783
  %v1074 = vunpack.c.l.b16 %v784
  %v1075 = vunpack.c.h.b16 %v784
  %v1076 = vunpack.c.l.b16 %v785
  %v1077 = vunpack.c.h.b16 %v785
  %v1078 = vunpack.c.l.b16 %v786
  %v1079 = vunpack.c.h.b16 %v786
  %v1080 = vunpack.c.l.b16 %v787
  %v1081 = vunpack.c.h.b16 %v787
  %v1082 = vunpack.c.l.b16 %v788
  %v1083 = vunpack.c.h.b16 %v788
  %v1084 = vunpack.c.l.b16 %v789
  %v1085 = vunpack.c.h.b16 %v789
  %v1086 = vunpack.c.l.b16 %v790
  %v1087 = vunpack.c.h.b16 %v790
  %v1088 = vunpack.c.l.b16 %v791
  %v1089 = vunpack.c.h.b16 %v791
  %v1090 = vunpack.c.l.b16 %v792
  %v1091 = vunpack.c.h.b16 %v792
  %v1092 = vunpack.c.l.b16 %v793
  %v1093 = vunpack.c.h.b16 %v793
  %v1094 = vunpack.c.l.b16 %v794
  %v1095 = vunpack.c.h.b16 %v794
  %v1096 = vunpack.c.l.b16 %v795
  %v1097 = vunpack.c.h.b16 %v795
  %v1098 = vunpack.c.l.b16 %v796
  %v1099 = vunpack.c.h.b16 %v796
  %v1100 = vunpack.c.l.b16 %v797
  %v1101 = vunpack.c.h.b16 %v797
  %v1102 = vunpack.c.l.b16 %v798
  %v1103 = vunpack.c.h.b16 %v798
  %v1104 = vunpack.c.l.b16 %v799
  %v1105 = vunpack.c.h.b16 %v799
  %v1106 = vunpack.c.l.b16 %v800
  %v1107 = vunpack.c.h.b16 %v800
  %v1108 = vunpack.c.l.b16 %v801
  %v1109 = vunpack.c.h.b16 %v801
  %v1110 = vunpack.c.l.b16 %v802
  %v1111 = vunpack.c.h.b16 %v802
  %v1112 = vunpack.c.l.b16 %v803
  %v1113 = vunpack.c.h.b16 %v803
  %v1114 = vunpack.c.l.b16 %v804
  %v1115 = vunpack.c.h.b16 %v804
  %v1116 = vunpack.c.l.b16 %v805
  %v1117 = vunpack.c.h.b16 %v805
  %v1118 = vunpack.c.l.b16 %v806
  %v1119 = vunpack.c.h.b16 %v806
  %v1120 = vunpack.c.l.b16 %v807
  %v1121 = vunpack.c.h.b16 %v807
  %v1122 = vunpack.c.l.b16 %v808
  %v1123 = vunpack.c.h.b16 %v808
  %v1124 = vunpack.c.l.b16 %v809
  %v1125 = vunpack.c.h.b16 %v809
  %v1126 = vunpack.c.l.b16 %v810
  %v1127 = vunpack.c.h.b16 %v810
  %v1128 = vunpack.c.l.b16 %v811
  %v1129 = vunpack.c.h.b16 %v811
  %v1130 = vunpack.c.l.b16 %v812
  %v1131 = vunpack.c.h.b16 %v812
  %v1132 = vunpack.c.l.b16 %v813
  %v1133 = vunpack.c.h.b16 %v813
  %v1134 = vunpack.c.l.b16 %v814
  %v1135 = vunpack.c.h.b16 %v814
  %v1136 = vunpack.c.l.b16 %v815
  %v1137 = vunpack.c.h.b16 %v815
  %v1138 = vunpack.c.l.b16 %v816
  %v1139 = vunpack.c.h.b16 %v816
  %v1140 = vunpack.c.l.b16 %v817
  %v1141 = vunpack.c.h.b16 %v817
  %v1142 = vunpack.c.l.b16 %v818
  %v1143 = vunpack.c.h.b16 %v818
  %v1144 = vunpack.c.l.b16 %v819
  %v1145 = vunpack.c.h.b16 %v819
  %v1146 = vunpack.c.l.b16 %v820
  %v1147 = vunpack.c.h.b16 %v820
  %v1148 = vunpack.c.l.b16 %v821
  %v1149 = vunpack.c.h.b16 %v821
  %v1150 = vunpack.c.l.b16 %v822
  %v1151 = vunpack.c.h.b16 %v822
  %v1152 = vunpack.c.l.b16 %v823
  %v1153 = vunpack.c.h.b16 %v823
  %v1154 = vunpack.c.l.b16 %v824
  %v1155 = vunpack.c.h.b16 %v824
  %v1156 = vunpack.c.l.b16 %v825
  %v1157 = vunpack.c.h.b16 %v825
  %v1158 = vunpack.c.l.b16 %v826
  %v1159 = vunpack.c.h.b16 %v826
  %v1160 = vunpack.c.l.b16 %v827
  %v1161 = vunpack.c.h.b16 %v827
  %v1162 = vunpack.c.l.b16 %v828
  %v1163 = vunpack.c.h.b16 %v828
  %v1164 = vunpack.c.l.b16 %v829
  %v1165 = vunpack.c.h.b16 %v829
  %v1166 = vunpack.c.l.b16 %v830
  %v1167 = vunpack.c.h.b16 %v830
  %v1168 = vunpack.c.l.b16 %v831
  %v1169 = vunpack.c.h.b16 %v831
  %v1170 = vunpack.c.l.b16 %v832
  %v1171 = vunpack.c.h.b16 %v832
  %v1172 = vunpack.c.l.b16 %v833
  %v1173 = vunpack.c.h.b16 %v833
  %v1174 = vunpack.c.l.b16 %v834
  %v1175 = vunpack.c.h.b16 %v834
  %v1176 = vunpack.c.l.b16 %v835
  %v1177 = vunpack.c.h.b16 %v835
  %v1178 = vunpack.c.l.b16 %v836
  %v1179 = vunpack.c.h.b16 %v836
  %v1180 = vunpack.c.l.b16 %v837
  %v1181 = vunpack.c.h.b16 %v837
  %v1182 = vunpack.c.l.b16 %v838
  %v1183 = vunpack.c.h.b16 %v838
  %v1184 = vunpack.c.l.b16 %v839
  %v1185 = vunpack.c.h.b16 %v839
  %v1186 = vunpack.c.l.b16 %v840
  %v1187 = vunpack.c.h.b16 %v840
  %v1188 = vunpack.c.l.b16 %v841
  %v1189 = vunpack.c.h.b16 %v841
  %v1190 = vunpack.c.l.b16 %v842
  %v1191 = vunpack.c.h.b16 %v842
  %v1192 = vunpack.c.l.b16 %v843
  %v1193 = vunpack.c.h.b16 %v843
  %v1194 = vunpack.c.l.b16 %v844
  %v1195 = vunpack.c.h.b16 %v844
  %v1196 = vunpack.c.l.b16 %v845
  %v1197 = vunpack.c.h.b16 %v845
  %v1198 = vunpack.c.l.b16 %v846
  %v1199 = vunpack.c.h.b16 %v846
  %v1200 = vunpack.c.l.b16 %v847
  %v1201 = vunpack.c.h.b16 %v847
  %v1202 = vunpack.c.l.b16 %v848
  %v1203 = vunpack.c.h.b16 %v848
  %v1204 = vunpack.c.l.b16 %v849
  %v1205 = vunpack.c.h.b16 %v849
  %v1206 = vunpack.c.l.b16 %v850
  %v1207 = vunpack.c.h.b16 %v850
  %v1208 = vunpack.c.l.b16 %v851
  %v1209 = vunpack.c.h.b16 %v851
  %v1210 = vunpack.c.l.b16 %v852
  %v1211 = vunpack.c.h.b16 %v852
  %v1212 = vunpack.c.l.b16 %v853
  %v1213 = vunpack.c.h.b16 %v853
  %v1214 = vunpack.c.l.b16 %v854
  %v1215 = vunpack.c.h.b16 %v854
  %v1216 = vunpack.c.l.b16 %v855
  %v1217 = vunpack.c.h.b16 %v855
  %v1218 = vunpack.c.l.b16 %v856
  %v1219 = vunpack.c.h.b16 %v856
  %v1220 = vunpack.c.l.b16 %v857
  %v1221 = vunpack.c.h.b16 %v857
  %v1222 = vunpack.c.l.b16 %v858
  %v1223 = vunpack.c.h.b16 %v858
  %v1224 = vunpack.c.l.b16 %v859
  %v1225 = vunpack.c.h.b16 %v859
  %v1226 = vunpack.c.l.b16 %v860
  %v1227 = vunpack.c.h.b16 %v860
  %v1228 = vunpack.c.l.b16 %v861
  %v1229 = vunpack.c.h.b16 %v861
  %v1230 = vunpack.c.l.b16 %v862
  %v1231 = vunpack.c.h.b16 %v862
  %v1232 = vunpack.c.l.b16 %v863
  %v1233 = vunpack.c.h.b16 %v863
  %v1234 = vunpack.c.l.b16 %v864
  %v1235 = vunpack.c.h.b16 %v864
  %v1236 = vunpack.c.l.b16 %v865
  %v1237 = vunpack.c.h.b16 %v865
  %v1238 = vunpack.c.l.b16 %v866
  %v1239 = vunpack.c.h.b16 %v866
  %v1240 = vunpack.c.l.b16 %v867
  %v1241 = vunpack.c.h.b16 %v867
  %v1242 = vunpack.c.l.b16 %v868
  %v1243 = vunpack.c.h.b16 %v868
  %v1244 = vunpack.c.l.b16 %v869
  %v1245 = vunpack.c.h.b16 %v869
  %v1246 = vunpack.c.l.b16 %v870
  %v1247 = vunpack.c.h.b16 %v870
  %v1248 = vunpack.c.l.b16 %v871
  %v1249 = vunpack.c.h.b16 %v871
  %v1250 = vunpack.c.l.b16 %v872
  %v1251 = vunpack.c.h.b16 %v872
  %v1252 = vunpack.c.l.b16 %v873
  %v1253 = vunpack.c.h.b16 %v873
  %v1254 = vunpack.c.l.b16 %v874
  %v1255 = vunpack.c.h.b16 %v874
  %v1256 = vunpack.c.l.b16 %v875
  %v1257 = vunpack.c.h.b16 %v875
  %v1258 = vunpack.c.l.b16 %v876
  %v1259 = vunpack.c.h.b16 %v876
  %v1260 = vunpack.c.l.b16 %v877
  %v1261 = vunpack.c.h.b16 %v877
  %v1262 = vunpack.c.l.b16 %v878
  %v1263 = vunpack.c.h.b16 %v878
  %v1264 = vunpack.c.l.b16 %v879
  %v1265 = vunpack.c.h.b16 %v879
  %v1266 = vunpack.c.l.b16 %v880
  %v1267 = vunpack.c.h.b16 %v880
  %v1268 = vunpack.c.l.b16 %v881
  %v1269 = vunpack.c.h.b16 %v881
  %v1270 = vunpack.c.l.b16 %v882
  %v1271 = vunpack.c.h.b16 %v882
  %v1272 = vunpack.c.l.b16 %v883
  %v1273 = vunpack.c.h.b16 %v883
  %v1274 = vunpack.c.l.b16 %v884
  %v1275 = vunpack.c.h.b16 %v884
  %v1276 = vunpack.c.l.b16 %v885
  %v1277 = vunpack.c.h.b16 %v885
  %v1278 = vunpack.c.l.b16 %v886
  %v1279 = vunpack.c.h.b16 %v886
  %v1280 = vunpack.c.l.b16 %v887
  %v1281 = vunpack.c.h.b16 %v887
  %v1282 = vunpack.c.l.b16 %v888
  %v1283 = vunpack.c.h.b16 %v888
  %v1284 = vunpack.c.l.b16 %v889
  %v1285 = vunpack.c.h.b16 %v889
  %v1286 = vunpack.c.l.b16 %v890
  %v1287 = vunpack.c.h.b16 %v890
  %v1288 = vunpack.c.l.b16 %v891
  %v1289 = vunpack.c.h.b16 %v891
  %v1290 = vunpack.c.l.b16 %v892
  %v1291 = vunpack.c.h.b16 %v892
  %v1292 = vunpack.c.l.b16 %v893
  %v1293 = vunpack.c.h.b16 %v893
  %v1294 = vunpack.c.l.b16 %v894
  %v1295 = vunpack.c.h.b16 %v894
  %v1296 = vunpack.c.l.b16 %v895
  %v1297 = vunpack.c.h.b16 %v895
  %v1298 = vunpack.c.l.b16 %v896
  %v1299 = vunpack.c.h.b16 %v896
  %v1300 = vunpack.c.l.b16 %v897
  %v1301 = vunpack.c.h.b16 %v897
  %v1302 = vunpack.c.l.b16 %v898
  %v1303 = vunpack.c.h.b16 %v898
  %v1304 = vpack.c.b16 %v1052, %v1048
  %v1305 = vpack.c.b16 %v1053, %v1049
  %v1306 = vpack.c.b16 %v1054, %v1050
  %v1307 = vpack.c.b16 %v1055, %v1051
  %v1308 = vpack.c.b16 %v1060, %v1056
  %v1309 = vpack.c.b16 %v1061, %v1057
  %v1310 = vpack.c.b16 %v1062, %v1058
  %v1311 = vpack.c.b16 %v1063, %v1059
  %v1312 = vpack.c.b16 %v1068, %v1064
  %v1313 = vpack.c.b16 %v1069, %v1065
  %v1314 = vpack.c.b16 %v1070, %v1066
  %v1315 = vpack.c.b16 %v1071, %v1067
  %v1316 = vpack.c.b16 %v1076, %v1072
  %v1317 = vpack.c.b16 %v1077, %v1073
  %v1318 = vpack.c.b16 %v1078, %v1074
  %v1319 = vpack.c.b16 %v1079, %v1075
  %v1320 = vpack.c.b16 %v1084, %v1080
  %v1321 = vpack.c.b16 %v1085, %v1081
  %v1322 = vpack.c.b16 %v1086, %v1082
  %v1323 = vpack.c.b16 %v1087, %v1083
  %v1324 = vpack.c.b16 %v1092, %v1088
  %v1325 = vpack.c.b16 %v1093, %v1089
  %v1326 = vpack.c.b16 %v1094, %v1090
  %v1327 = vpack.c.b16 %v1095, %v1091
  %v1328 = vpack.c.b16 %v1100, %v1096
  %v1329 = vpack.c.b16 %v1101, %v1097
  %v1330 = vpack.c.b16 %v1102, %v1098
  %v1331 = vpack.c.b16 %v1103, %v1099
  %v1332 = vpack.c.b16 %v1108, %v1104
  %v1333 = vpack.c.b16 %v1109, %v1105
  %v1334 = vpack.c.b16 %v1110, %v1106
  %v1335 = vpack.c.b16 %v1111, %v1107
  %v1336 = vpack.c.b16 %v1116, %v1112
  %v1337 = vpack.c.b16 %v1117, %v1113
  %v1338 = vpack.c.b16 %v1118, %v1114
  %v1339 = vpack.c.b16 %v1119, %v1115
  %v1340 = vpack.c.b16 %v1124, %v1120
  %v1341 = vpack.c.b16 %v1125, %v1121
  %v1342 = vpack.c.b16 %v1126, %v1122
  %v1343 = vpack.c.b16 %v1127, %v1123
  %v1344 = vpack.c.b16 %v1132, %v1128
  %v1345 = vpack.c.b16 %v1133, %v1129
  %v1346 = vpack.c.b16 %v1134, %v1130
  %v1347 = vpack.c.b16 %v1135, %v1131
  %v1348 = vpack.c.b16 %v1140, %v1136
  %v1349 = vpack.c.b16 %v1141, %v1137
  %v1350 = vpack.c.b16 %v1142, %v1138
  %v1351 = vpack.c.b16 %v1143, %v1139
  %v1352 = vpack.c.b16 %v1148, %v1144
  %v1353 = vpack.c.b16 %v1149, %v1145
  %v1354 = vpack.c.b16 %v1150, %v1146
  %v1355 = vpack.c.b16 %v1151, %v1147
  %v1356 = vpack.c.b16 %v1156, %v1152
  %v1357 = vpack.c.b16 %v1157, %v1153
  %v1358 = vpack.c.b16 %v1158, %v1154
  %v1359 = vpack.c.b16 %v1159, %v1155
  %v1360 = vpack.c.b16 %v1164, %v1160
  %v1361 = vpack.c.b16 %v1165, %v1161
  %v1362 = vpack.c.b16 %v1166, %v1162
  %v1363 = vpack.c.b16 %v1167, %v1163
  %v1364 = vpack.c.b16 %v1172, %v1168
  %v1365 = vpack.c.b16 %v1173, %v1169
  %v1366 = vpack.c.b16 %v1174, %v1170
  %v1367 = vpack.c.b16 %v1175, %v1171
  %v1368 = vpack.c.b16 %v1180, %v1176
  %v1369 = vpack.c.b16 %v1181, %v1177
  %v1370 = vpack.c.b16 %v1182, %v1178
  %v1371 = vpack.c.b16 %v1183, %v1179
  %v1372 = vpack.c.b16 %v1188, %v1184
  %v1373 = vpack.c.b16 %v1189, %v1185
  %v1374 = vpack.c.b16 %v1190, %v1186
  %v1375 = vpack.c.b16 %v1191, %v1187
  %v1376 = vpack.c.b16 %v1196, %v1192
  %v1377 = vpack.c.b16 %v1197, %v1193
  %v1378 = vpack.c.b16 %v1198, %v1194
  %v1379 = vpack.c.b16 %v1199, %v1195
  %v1380 = vpack.c.b16 %v1204, %v1200
  %v1381 = vpack.c.b16 %v1205, %v1201
  %v1382 = vpack.c.b16 %v1206, %v1202
  %v1383 = vpack.c.b16 %v1207, %v1203
  %v1384 = vpack.c.b16 %v1212, %v1208
  %v1385 = vpack.c.b16 %v1213, %v1209
  %v1386 = vpack.c.b16 %v1214, %v1210
  %v1387 = vpack.c.b16 %v1215, %v1211
  %v1388 = vpack.c.b16 %v1220, %v1216
  %v1389 = vpack.c.b16 %v1221, %v1217
  %v1390 = vpack.c.b16 %v1222, %v1218
  %v1391 = vpack.c.b16 %v1223, %v1219
  %v1392 = vpack.c.b16 %v1228, %v1224
  %v1393 = vpack.c.b16 %v1229, %v1225
  %v1394 = vpack.c.b16 %v1230, %v1226
  %v1395 = vpack.c.b16 %v1231, %v1227
  %v1396 = vpack.c.b16 %v1236, %v1232
  %v1397 = vpack.c.b16 %v1237, %v1233
  %v1398 = vpack.c.b16 %v1238, %v1234
  %v1399 = vpack.c.b16 %v1239, %v1235
  %v1400 = vpack.c.b16 %v1244, %v1240
  %v1401 = vpack.c.b16 %v1245, %v1241
  %v1402 = vpack.c.b16 %v1246, %v1242
  %v1403 = vpack.c.b16 %v1247, %v1243
  %v1404 = vpack.c.b16 %v1252, %v1248
  %v1405 = vpack.c.b16 %v1253, %v1249
  %v1406 = vpack.c.b16 %v1254, %v1250
  %v1407 = vpack.c.b16 %v1255, %v1251
  %v1408 = vpack.c.b16 %v1260, %v1256
  %v1409 = vpack.c.b16 %v1261, %v1257
  %v1410 = vpack.c.b16 %v1262, %v1258
  %v1411 = vpack.c.b16 %v1263, %v1259
  %v1412 = vpack.c.b16 %v1268, %v1264
  %v1413 = vpack.c.b16 %v1269, %v1265
  %v1414 = vpack.c.b16 %v1270, %v1266
  %v1415 = vpack.c.b16 %v1271, %v1267
  %v1416 = vpack.c.b16 %v1276, %v1272
  %v1417 = vpack.c.b16 %v1277, %v1273
  %v1418 = vpack.c.b16 %v1278, %v1274
  %v1419 = vpack.c.b16 %v1279, %v1275
  %v1420 = vpack.c.b16 %v1284, %v1280
  %v1421 = vpack.c.b16 %v1285, %v1281
  %v1422 = vpack.c.b16 %v1286, %v1282
  %v1423 = vpack.c.b16 %v1287, %v1283
  %v1424 = vpack.c.b16 %v1292, %v1288
  %v1425 = vpack.c.b16 %v1293, %v1289
  %v1426 = vpack.c.b16 %v1294, %v1290
  %v1427 = vpack.c.b16 %v1295, %v1291
  %v1428 = vpack.c.b16 %v1300, %v1296
  %v1429 = vpack.c.b16 %v1301, %v1297
  %v1430 = vpack.c.b16 %v1302, %v1298
  %v1431 = vpack.c.b16 %v1303, %v1299
  %1560 = vmatprep.subr.bf16.mxu0 %v1305
  %1561 = vmatpush1.bf16.msra.mxu0 %v1304
  %1562 = vmatprep.subr.bf16.mxu0 %v1309
  %1563 = vmatpush1.bf16.msra.mxu0 %v1308
  %1564 = vmatprep.subr.bf16.mxu0 %v1313
  %1565 = vmatpush1.bf16.msra.mxu0 %v1312
  %1566 = vmatprep.subr.bf16.mxu0 %v1317
  %1567 = vmatpush1.bf16.msra.mxu0 %v1316
  %1568 = vmatprep.subr.bf16.mxu0 %v1321
  %1569 = vmatpush1.bf16.msra.mxu0 %v1320
  %1570 = vmatprep.subr.bf16.mxu0 %v1325
  %1571 = vmatpush1.bf16.msra.mxu0 %v1324
  %1572 = vmatprep.subr.bf16.mxu0 %v1329
  %1573 = vmatpush1.bf16.msra.mxu0 %v1328
  %1574 = vmatprep.subr.bf16.mxu0 %v1333
  %1575 = vmatpush1.bf16.msra.mxu0 %v1332
  %1576 = vmatprep.subr.bf16.mxu0 %v1337
  %1577 = vmatpush1.bf16.msra.mxu0 %v1336
  %1578 = vmatprep.subr.bf16.mxu0 %v1341
  %1579 = vmatpush1.bf16.msra.mxu0 %v1340
  %1580 = vmatprep.subr.bf16.mxu0 %v1345
  %1581 = vmatpush1.bf16.msra.mxu0 %v1344
  %1582 = vmatprep.subr.bf16.mxu0 %v1349
  %1583 = vmatpush1.bf16.msra.mxu0 %v1348
  %1584 = vmatprep.subr.bf16.mxu0 %v1353
  %1585 = vmatpush1.bf16.msra.mxu0 %v1352
  %1586 = vmatprep.subr.bf16.mxu0 %v1357
  %1587 = vmatpush1.bf16.msra.mxu0 %v1356
  %1588 = vmatprep.subr.bf16.mxu0 %v1361
  %1589 = vmatpush1.bf16.msra.mxu0 %v1360
  %1590 = vmatprep.subr.bf16.mxu0 %v1365
  %1591 = vmatpush1.bf16.msra.mxu0 %v1364
  %1592 = vmatprep.mubr.bf16.mxu0 %v766
  %1593 = vmatmul.mubr.bf16.gmra.mrb[0].mxu0 %v765
  %v1594 = vpop.f32.mrb[0].mxu0
  %v1595 = vadd.f32 %v903, %v1594
  %v1596 = vpop.f32.mrb[0].mxu0
  %v1597 = vadd.f32 %v907, %v1596
  %v1598 = vpop.f32.mrb[0].mxu0
  %v1599 = vadd.f32 %v903, %v1598
  %v1600 = vpop.f32.mrb[0].mxu0
  %v1601 = vadd.f32 %v907, %v1600
  %1602 = vdwg.mxu0
  %1603 = vmatprep.subr.bf16.mxu0 %v1369
  %1604 = vmatpush1.bf16.msra.mxu0 %v1368
  %1605 = vmatprep.subr.bf16.mxu0 %v1373
  %1606 = vmatpush1.bf16.msra.mxu0 %v1372
  %1607 = vmatprep.subr.bf16.mxu0 %v1377
  %1608 = vmatpush1.bf16.msra.mxu0 %v1376
  %1609 = vmatprep.subr.bf16.mxu0 %v1381
  %1610 = vmatpush1.bf16.msra.mxu0 %v1380
  %1611 = vmatprep.subr.bf16.mxu0 %v1385
  %1612 = vmatpush1.bf16.msra.mxu0 %v1384
  %1613 = vmatprep.subr.bf16.mxu0 %v1389
  %1614 = vmatpush1.bf16.msra.mxu0 %v1388
  %1615 = vmatprep.subr.bf16.mxu0 %v1393
  %1616 = vmatpush1.bf16.msra.mxu0 %v1392
  %1617 = vmatprep.subr.bf16.mxu0 %v1397
  %1618 = vmatpush1.bf16.msra.mxu0 %v1396
  %1619 = vmatprep.subr.bf16.mxu0 %v1401
  %1620 = vmatpush1.bf16.msra.mxu0 %v1400
  %1621 = vmatprep.subr.bf16.mxu0 %v1405
  %1622 = vmatpush1.bf16.msra.mxu0 %v1404
  %1623 = vmatprep.subr.bf16.mxu0 %v1409
  %1624 = vmatpush1.bf16.msra.mxu0 %v1408
  %1625 = vmatprep.subr.bf16.mxu0 %v1413
  %1626 = vmatpush1.bf16.msra.mxu0 %v1412
  %1627 = vmatprep.subr.bf16.mxu0 %v1417
  %1628 = vmatpush1.bf16.msra.mxu0 %v1416
  %1629 = vmatprep.subr.bf16.mxu0 %v1421
  %1630 = vmatpush1.bf16.msra.mxu0 %v1420
  %1631 = vmatprep.subr.bf16.mxu0 %v1425
  %1632 = vmatpush1.bf16.msra.mxu0 %v1424
  %1633 = vmatprep.subr.bf16.mxu0 %v1429
  %1634 = vmatpush1.bf16.msra.mxu0 %v1428
  %1635 = vmatprep.mubr.bf16.mxu0 %v768
  %1636 = vmatmul.mubr.bf16.gmra.mrb[0].mxu0 %v767
  %v1637 = vpop.f32.mrb[0].mxu0
  %v1638 = vadd.f32 %v1595, %v1637
  %v1639 = vpop.f32.mrb[0].mxu0
  %v1640 = vadd.f32 %v1597, %v1639
  %v1641 = vpop.f32.mrb[0].mxu0
  %v1642 = vadd.f32 %v1599, %v1641
  %v1643 = vpop.f32.mrb[0].mxu0
  %v1644 = vadd.f32 %v1601, %v1643
  %1645 = vdwg.mxu0
  %1646 = vmatprep.subr.bf16.mxu0 %v1307
  %1647 = vmatpush1.bf16.msra.mxu0 %v1306
  %1648 = vmatprep.subr.bf16.mxu0 %v1311
  %1649 = vmatpush1.bf16.msra.mxu0 %v1310
  %1650 = vmatprep.subr.bf16.mxu0 %v1315
  %1651 = vmatpush1.bf16.msra.mxu0 %v1314
  %1652 = vmatprep.subr.bf16.mxu0 %v1319
  %1653 = vmatpush1.bf16.msra.mxu0 %v1318
  %1654 = vmatprep.subr.bf16.mxu0 %v1323
  %1655 = vmatpush1.bf16.msra.mxu0 %v1322
  %1656 = vmatprep.subr.bf16.mxu0 %v1327
  %1657 = vmatpush1.bf16.msra.mxu0 %v1326
  %1658 = vmatprep.subr.bf16.mxu0 %v1331
  %1659 = vmatpush1.bf16.msra.mxu0 %v1330
  %1660 = vmatprep.subr.bf16.mxu0 %v1335
  %1661 = vmatpush1.bf16.msra.mxu0 %v1334
  %1662 = vmatprep.subr.bf16.mxu0 %v1339
  %1663 = vmatpush1.bf16.msra.mxu0 %v1338
  %1664 = vmatprep.subr.bf16.mxu0 %v1343
  %1665 = vmatpush1.bf16.msra.mxu0 %v1342
  %1666 = vmatprep.subr.bf16.mxu0 %v1347
  %1667 = vmatpush1.bf16.msra.mxu0 %v1346
  %1668 = vmatprep.subr.bf16.mxu0 %v1351
  %1669 = vmatpush1.bf16.msra.mxu0 %v1350
  %1670 = vmatprep.subr.bf16.mxu0 %v1355
  %1671 = vmatpush1.bf16.msra.mxu0 %v1354
  %1672 = vmatprep.subr.bf16.mxu0 %v1359
  %1673 = vmatpush1.bf16.msra.mxu0 %v1358
  %1674 = vmatprep.subr.bf16.mxu0 %v1363
  %1675 = vmatpush1.bf16.msra.mxu0 %v1362
  %1676 = vmatprep.subr.bf16.mxu0 %v1367
  %1677 = vmatpush1.bf16.msra.mxu0 %v1366
  %1678 = vmatprep.mubr.bf16.mxu0 %v766
  %1679 = vmatmul.mubr.bf16.gmra.mrb[0].mxu0 %v765
  %v1680 = vpop.f32.mrb[0].mxu0
  %v1681 = vadd.f32 %v911, %v1680
  %v1682 = vpop.f32.mrb[0].mxu0
  %v1683 = vadd.f32 %v915, %v1682
  %v1684 = vpop.f32.mrb[0].mxu0
  %v1685 = vadd.f32 %v911, %v1684
  %v1686 = vpop.f32.mrb[0].mxu0
  %v1687 = vadd.f32 %v915, %v1686
  %1688 = vdwg.mxu0
  %1689 = vmatprep.subr.bf16.mxu0 %v1371
  %1690 = vmatpush1.bf16.msra.mxu0 %v1370
  %1691 = vmatprep.subr.bf16.mxu0 %v1375
  %1692 = vmatpush1.bf16.msra.mxu0 %v1374
  %1693 = vmatprep.subr.bf16.mxu0 %v1379
  %1694 = vmatpush1.bf16.msra.mxu0 %v1378
  %1695 = vmatprep.subr.bf16.mxu0 %v1383
  %1696 = vmatpush1.bf16.msra.mxu0 %v1382
  %1697 = vmatprep.subr.bf16.mxu0 %v1387
  %1698 = vmatpush1.bf16.msra.mxu0 %v1386
  %1699 = vmatprep.subr.bf16.mxu0 %v1391
  %1700 = vmatpush1.bf16.msra.mxu0 %v1390
  %1701 = vmatprep.subr.bf16.mxu0 %v1395
  %1702 = vmatpush1.bf16.msra.mxu0 %v1394
  %1703 = vmatprep.subr.bf16.mxu0 %v1399
  %1704 = vmatpush1.bf16.msra.mxu0 %v1398
  %1705 = vmatprep.subr.bf16.mxu0 %v1403
  %1706 = vmatpush1.bf16.msra.mxu0 %v1402
  %1707 = vmatprep.subr.bf16.mxu0 %v1407
  %1708 = vmatpush1.bf16.msra.mxu0 %v1406
  %1709 = vmatprep.subr.bf16.mxu0 %v1411
  %1710 = vmatpush1.bf16.msra.mxu0 %v1410
  %1711 = vmatprep.subr.bf16.mxu0 %v1415
  %1712 = vmatpush1.bf16.msra.mxu0 %v1414
  %1713 = vmatprep.subr.bf16.mxu0 %v1419
  %1714 = vmatpush1.bf16.msra.mxu0 %v1418
  %1715 = vmatprep.subr.bf16.mxu0 %v1423
  %1716 = vmatpush1.bf16.msra.mxu0 %v1422
  %1717 = vmatprep.subr.bf16.mxu0 %v1427
  %1718 = vmatpush1.bf16.msra.mxu0 %v1426
  %1719 = vmatprep.subr.bf16.mxu0 %v1431
  %1720 = vmatpush1.bf16.msra.mxu0 %v1430
  %1721 = vmatprep.mubr.bf16.mxu0 %v768
  %1722 = vmatmul.mubr.bf16.gmra.mrb[0].mxu0 %v767
  %v1723 = vpop.f32.mrb[0].mxu0
  %v1724 = vadd.f32 %v1681, %v1723
  %v1725 = vpop.f32.mrb[0].mxu0
  %v1726 = vadd.f32 %v1683, %v1725
  %v1727 = vpop.f32.mrb[0].mxu0
  %v1728 = vadd.f32 %v1685, %v1727
  %v1729 = vpop.f32.mrb[0].mxu0
  %v1730 = vadd.f32 %v1687, %v1729
  %1731 = vdwg.mxu0
  %v1732 = vmax.f32 %v1638, 0.0
  %v1733 = vmax.f32 %v1640, 0.0
  %v1734 = vmax.f32 %v1724, 0.0
  %v1735 = vmax.f32 %v1726, 0.0
  %v1736 = vmax.f32 %v1642, 0.0
  %v1737 = vmax.f32 %v1644, 0.0
  %v1738 = vmax.f32 %v1728, 0.0
  %v1739 = vmax.f32 %v1730, 0.0
  %v1740 = vpack.c.bf16 %v1736, %v1732
  %v1741 = vpack.c.bf16 %v1737, %v1733
  %v1742 = vpack.c.bf16 %v1738, %v1734
  %v1743 = vpack.c.bf16 %v1739, %v1735
  %s1744 = scalar_lea.vmem %s2, 2
  %v1745 = vld [vmem:[%s1744] ss:$8 sm:$0x3]
  %v1746 = vld [vmem:[%s5] sm:$0xff]
  %v1747 = vld [vmem:[%s5 + $0x8] sm:$0xff]
  %v1748 = vld [vmem:[%s5 + $0x10] sm:$0xff]
  %v1749 = vld [vmem:[%s5 + $0x18] sm:$0xff]
  %v1750 = vld [vmem:[%s5 + $0x20] sm:$0xff]
  %v1751 = vld [vmem:[%s5 + $0x28] sm:$0xff]
  %v1752 = vld [vmem:[%s5 + $0x30] sm:$0xff]
  %v1753 = vld [vmem:[%s5 + $0x38] sm:$0xff]
  %v1754 = vld [vmem:[%s5 + $0x40] sm:$0xff]
  %v1755 = vld [vmem:[%s5 + $0x48] sm:$0xff]
  %v1756 = vld [vmem:[%s5 + $0x50] sm:$0xff]
  %v1757 = vld [vmem:[%s5 + $0x58] sm:$0xff]
  %v1758 = vld [vmem:[%s5 + $0x60] sm:$0xff]
  %v1759 = vld [vmem:[%s5 + $0x68] sm:$0xff]
  %v1760 = vld [vmem:[%s5 + $0x70] sm:$0xff]
  %v1761 = vld [vmem:[%s5 + $0x78] sm:$0xff]
  %v1762 = vld [vmem:[%s5 + $0x80] sm:$0xff]
  %v1763 = vld [vmem:[%s5 + $0x88] sm:$0xff]
  %v1764 = vld [vmem:[%s5 + $0x90] sm:$0xff]
  %v1765 = vld [vmem:[%s5 + $0x98] sm:$0xff]
  %v1766 = vld [vmem:[%s5 + $0xa0] sm:$0xff]
  %v1767 = vld [vmem:[%s5 + $0xa8] sm:$0xff]
  %v1768 = vld [vmem:[%s5 + $0xb0] sm:$0xff]
  %v1769 = vld [vmem:[%s5 + $0xb8] sm:$0xff]
  %v1770 = vld [vmem:[%s5 + $0xc0] sm:$0xff]
  %v1771 = vld [vmem:[%s5 + $0xc8] sm:$0xff]
  %v1772 = vld [vmem:[%s5 + $0xd0] sm:$0xff]
  %v1773 = vld [vmem:[%s5 + $0xd8] sm:$0xff]
  %v1774 = vld [vmem:[%s5 + $0xe0] sm:$0xff]
  %v1775 = vld [vmem:[%s5 + $0xe8] sm:$0xff]
  %v1776 = vld [vmem:[%s5 + $0xf0] sm:$0xff]
  %v1777 = vld [vmem:[%s5 + $0xf8] sm:$0xff]
  %v1778 = vld [vmem:[%s5 + $0x100] sm:$0xff]
  %v1779 = vld [vmem:[%s5 + $0x108] sm:$0xff]
  %v1780 = vld [vmem:[%s5 + $0x110] sm:$0xff]
  %v1781 = vld [vmem:[%s5 + $0x118] sm:$0xff]
  %v1782 = vld [vmem:[%s5 + $0x120] sm:$0xff]
  %v1783 = vld [vmem:[%s5 + $0x128] sm:$0xff]
  %v1784 = vld [vmem:[%s5 + $0x130] sm:$0xff]
  %v1785 = vld [vmem:[%s5 + $0x138] sm:$0xff]
  %v1786 = vld [vmem:[%s5 + $0x140] sm:$0xff]
  %v1787 = vld [vmem:[%s5 + $0x148] sm:$0xff]
  %v1788 = vld [vmem:[%s5 + $0x150] sm:$0xff]
  %v1789 = vld [vmem:[%s5 + $0x158] sm:$0xff]
  %v1790 = vld [vmem:[%s5 + $0x160] sm:$0xff]
  %v1791 = vld [vmem:[%s5 + $0x168] sm:$0xff]
  %v1792 = vld [vmem:[%s5 + $0x170] sm:$0xff]
  %v1793 = vld [vmem:[%s5 + $0x178] sm:$0xff]
  %v1794 = vld [vmem:[%s5 + $0x180] sm:$0xff]
  %v1795 = vld [vmem:[%s5 + $0x188] sm:$0xff]
  %v1796 = vld [vmem:[%s5 + $0x190] sm:$0xff]
  %v1797 = vld [vmem:[%s5 + $0x198] sm:$0xff]
  %v1798 = vld [vmem:[%s5 + $0x1a0] sm:$0xff]
  %v1799 = vld [vmem:[%s5 + $0x1a8] sm:$0xff]
  %v1800 = vld [vmem:[%s5 + $0x1b0] sm:$0xff]
  %v1801 = vld [vmem:[%s5 + $0x1b8] sm:$0xff]
  %v1802 = vld [vmem:[%s5 + $0x1c0] sm:$0xff]
  %v1803 = vld [vmem:[%s5 + $0x1c8] sm:$0xff]
  %v1804 = vld [vmem:[%s5 + $0x1d0] sm:$0xff]
  %v1805 = vld [vmem:[%s5 + $0x1d8] sm:$0xff]
  %v1806 = vld [vmem:[%s5 + $0x1e0] sm:$0xff]
  %v1807 = vld [vmem:[%s5 + $0x1e8] sm:$0xff]
  %v1808 = vld [vmem:[%s5 + $0x1f0] sm:$0xff]
  %v1809 = vld [vmem:[%s5 + $0x1f8] sm:$0xff]
  %v1811 = vlaneseq
  %v1812 = vshrl.u32 %v1811, 7
  %v1813 = vsub.s32 0, %v1812
  %v1814 = vrot.slane %v1745, %v1813
  %v1815 = vlaneseq
  %v1816 = vshrl.u32 %v1815, 7
  %v1817 = vsub.s32 1, %v1816
  %v1818 = vrot.slane %v1745, %v1817
  %v1885 = vunpack.c.l.b16 %v1746
  %v1886 = vunpack.c.h.b16 %v1746
  %v1887 = vunpack.c.l.b16 %v1747
  %v1888 = vunpack.c.h.b16 %v1747
  %v1889 = vunpack.c.l.b16 %v1748
  %v1890 = vunpack.c.h.b16 %v1748
  %v1891 = vunpack.c.l.b16 %v1749
  %v1892 = vunpack.c.h.b16 %v1749
  %v1893 = vunpack.c.l.b16 %v1750
  %v1894 = vunpack.c.h.b16 %v1750
  %v1895 = vunpack.c.l.b16 %v1751
  %v1896 = vunpack.c.h.b16 %v1751
  %v1897 = vunpack.c.l.b16 %v1752
  %v1898 = vunpack.c.h.b16 %v1752
  %v1899 = vunpack.c.l.b16 %v1753
  %v1900 = vunpack.c.h.b16 %v1753
  %v1901 = vunpack.c.l.b16 %v1754
  %v1902 = vunpack.c.h.b16 %v1754
  %v1903 = vunpack.c.l.b16 %v1755
  %v1904 = vunpack.c.h.b16 %v1755
  %v1905 = vunpack.c.l.b16 %v1756
  %v1906 = vunpack.c.h.b16 %v1756
  %v1907 = vunpack.c.l.b16 %v1757
  %v1908 = vunpack.c.h.b16 %v1757
  %v1909 = vunpack.c.l.b16 %v1758
  %v1910 = vunpack.c.h.b16 %v1758
  %v1911 = vunpack.c.l.b16 %v1759
  %v1912 = vunpack.c.h.b16 %v1759
  %v1913 = vunpack.c.l.b16 %v1760
  %v1914 = vunpack.c.h.b16 %v1760
  %v1915 = vunpack.c.l.b16 %v1761
  %v1916 = vunpack.c.h.b16 %v1761
  %v1917 = vunpack.c.l.b16 %v1762
  %v1918 = vunpack.c.h.b16 %v1762
  %v1919 = vunpack.c.l.b16 %v1763
  %v1920 = vunpack.c.h.b16 %v1763
  %v1921 = vunpack.c.l.b16 %v1764
  %v1922 = vunpack.c.h.b16 %v1764
  %v1923 = vunpack.c.l.b16 %v1765
  %v1924 = vunpack.c.h.b16 %v1765
  %v1925 = vunpack.c.l.b16 %v1766
  %v1926 = vunpack.c.h.b16 %v1766
  %v1927 = vunpack.c.l.b16 %v1767
  %v1928 = vunpack.c.h.b16 %v1767
  %v1929 = vunpack.c.l.b16 %v1768
  %v1930 = vunpack.c.h.b16 %v1768
  %v1931 = vunpack.c.l.b16 %v1769
  %v1932 = vunpack.c.h.b16 %v1769
  %v1933 = vunpack.c.l.b16 %v1770
  %v1934 = vunpack.c.h.b16 %v1770
  %v1935 = vunpack.c.l.b16 %v1771
  %v1936 = vunpack.c.h.b16 %v1771
  %v1937 = vunpack.c.l.b16 %v1772
  %v1938 = vunpack.c.h.b16 %v1772
  %v1939 = vunpack.c.l.b16 %v1773
  %v1940 = vunpack.c.h.b16 %v1773
  %v1941 = vunpack.c.l.b16 %v1774
  %v1942 = vunpack.c.h.b16 %v1774
  %v1943 = vunpack.c.l.b16 %v1775
  %v1944 = vunpack.c.h.b16 %v1775
  %v1945 = vunpack.c.l.b16 %v1776
  %v1946 = vunpack.c.h.b16 %v1776
  %v1947 = vunpack.c.l.b16 %v1777
  %v1948 = vunpack.c.h.b16 %v1777
  %v1949 = vunpack.c.l.b16 %v1778
  %v1950 = vunpack.c.h.b16 %v1778
  %v1951 = vunpack.c.l.b16 %v1779
  %v1952 = vunpack.c.h.b16 %v1779
  %v1953 = vunpack.c.l.b16 %v1780
  %v1954 = vunpack.c.h.b16 %v1780
  %v1955 = vunpack.c.l.b16 %v1781
  %v1956 = vunpack.c.h.b16 %v1781
  %v1957 = vunpack.c.l.b16 %v1782
  %v1958 = vunpack.c.h.b16 %v1782
  %v1959 = vunpack.c.l.b16 %v1783
  %v1960 = vunpack.c.h.b16 %v1783
  %v1961 = vunpack.c.l.b16 %v1784
  %v1962 = vunpack.c.h.b16 %v1784
  %v1963 = vunpack.c.l.b16 %v1785
  %v1964 = vunpack.c.h.b16 %v1785
  %v1965 = vunpack.c.l.b16 %v1786
  %v1966 = vunpack.c.h.b16 %v1786
  %v1967 = vunpack.c.l.b16 %v1787
  %v1968 = vunpack.c.h.b16 %v1787
  %v1969 = vunpack.c.l.b16 %v1788
  %v1970 = vunpack.c.h.b16 %v1788
  %v1971 = vunpack.c.l.b16 %v1789
  %v1972 = vunpack.c.h.b16 %v1789
  %v1973 = vunpack.c.l.b16 %v1790
  %v1974 = vunpack.c.h.b16 %v1790
  %v1975 = vunpack.c.l.b16 %v1791
  %v1976 = vunpack.c.h.b16 %v1791
  %v1977 = vunpack.c.l.b16 %v1792
  %v1978 = vunpack.c.h.b16 %v1792
  %v1979 = vunpack.c.l.b16 %v1793
  %v1980 = vunpack.c.h.b16 %v1793
  %v1981 = vunpack.c.l.b16 %v1794
  %v1982 = vunpack.c.h.b16 %v1794
  %v1983 = vunpack.c.l.b16 %v1795
  %v1984 = vunpack.c.h.b16 %v1795
  %v1985 = vunpack.c.l.b16 %v1796
  %v1986 = vunpack.c.h.b16 %v1796
  %v1987 = vunpack.c.l.b16 %v1797
  %v1988 = vunpack.c.h.b16 %v1797
  %v1989 = vunpack.c.l.b16 %v1798
  %v1990 = vunpack.c.h.b16 %v1798
  %v1991 = vunpack.c.l.b16 %v1799
  %v1992 = vunpack.c.h.b16 %v1799
  %v1993 = vunpack.c.l.b16 %v1800
  %v1994 = vunpack.c.h.b16 %v1800
  %v1995 = vunpack.c.l.b16 %v1801
  %v1996 = vunpack.c.h.b16 %v1801
  %v1997 = vunpack.c.l.b16 %v1802
  %v1998 = vunpack.c.h.b16 %v1802
  %v1999 = vunpack.c.l.b16 %v1803
  %v2000 = vunpack.c.h.b16 %v1803
  %v2001 = vunpack.c.l.b16 %v1804
  %v2002 = vunpack.c.h.b16 %v1804
  %v2003 = vunpack.c.l.b16 %v1805
  %v2004 = vunpack.c.h.b16 %v1805
  %v2005 = vunpack.c.l.b16 %v1806
  %v2006 = vunpack.c.h.b16 %v1806
  %v2007 = vunpack.c.l.b16 %v1807
  %v2008 = vunpack.c.h.b16 %v1807
  %v2009 = vunpack.c.l.b16 %v1808
  %v2010 = vunpack.c.h.b16 %v1808
  %v2011 = vunpack.c.l.b16 %v1809
  %v2012 = vunpack.c.h.b16 %v1809
  %v2013 = vpack.c.b16 %v1887, %v1885
  %v2014 = vpack.c.b16 %v1888, %v1886
  %v2015 = vpack.c.b16 %v1891, %v1889
  %v2016 = vpack.c.b16 %v1892, %v1890
  %v2017 = vpack.c.b16 %v1895, %v1893
  %v2018 = vpack.c.b16 %v1896, %v1894
  %v2019 = vpack.c.b16 %v1899, %v1897
  %v2020 = vpack.c.b16 %v1900, %v1898
  %v2021 = vpack.c.b16 %v1903, %v1901
  %v2022 = vpack.c.b16 %v1904, %v1902
  %v2023 = vpack.c.b16 %v1907, %v1905
  %v2024 = vpack.c.b16 %v1908, %v1906
  %v2025 = vpack.c.b16 %v1911, %v1909
  %v2026 = vpack.c.b16 %v1912, %v1910
  %v2027 = vpack.c.b16 %v1915, %v1913
  %v2028 = vpack.c.b16 %v1916, %v1914
  %v2029 = vpack.c.b16 %v1919, %v1917
  %v2030 = vpack.c.b16 %v1920, %v1918
  %v2031 = vpack.c.b16 %v1923, %v1921
  %v2032 = vpack.c.b16 %v1924, %v1922
  %v2033 = vpack.c.b16 %v1927, %v1925
  %v2034 = vpack.c.b16 %v1928, %v1926
  %v2035 = vpack.c.b16 %v1931, %v1929
  %v2036 = vpack.c.b16 %v1932, %v1930
  %v2037 = vpack.c.b16 %v1935, %v1933
  %v2038 = vpack.c.b16 %v1936, %v1934
  %v2039 = vpack.c.b16 %v1939, %v1937
  %v2040 = vpack.c.b16 %v1940, %v1938
  %v2041 = vpack.c.b16 %v1943, %v1941
  %v2042 = vpack.c.b16 %v1944, %v1942
  %v2043 = vpack.c.b16 %v1947, %v1945
  %v2044 = vpack.c.b16 %v1948, %v1946
  %v2045 = vpack.c.b16 %v1951, %v1949
  %v2046 = vpack.c.b16 %v1952, %v1950
  %v2047 = vpack.c.b16 %v1955, %v1953
  %v2048 = vpack.c.b16 %v1956, %v1954
  %v2049 = vpack.c.b16 %v1959, %v1957
  %v2050 = vpack.c.b16 %v1960, %v1958
  %v2051 = vpack.c.b16 %v1963, %v1961
  %v2052 = vpack.c.b16 %v1964, %v1962
  %v2053 = vpack.c.b16 %v1967, %v1965
  %v2054 = vpack.c.b16 %v1968, %v1966
  %v2055 = vpack.c.b16 %v1971, %v1969
  %v2056 = vpack.c.b16 %v1972, %v1970
  %v2057 = vpack.c.b16 %v1975, %v1973
  %v2058 = vpack.c.b16 %v1976, %v1974
  %v2059 = vpack.c.b16 %v1979, %v1977
  %v2060 = vpack.c.b16 %v1980, %v1978
  %v2061 = vpack.c.b16 %v1983, %v1981
  %v2062 = vpack.c.b16 %v1984, %v1982
  %v2063 = vpack.c.b16 %v1987, %v1985
  %v2064 = vpack.c.b16 %v1988, %v1986
  %v2065 = vpack.c.b16 %v1991, %v1989
  %v2066 = vpack.c.b16 %v1992, %v1990
  %v2067 = vpack.c.b16 %v1995, %v1993
  %v2068 = vpack.c.b16 %v1996, %v1994
  %v2069 = vpack.c.b16 %v1999, %v1997
  %v2070 = vpack.c.b16 %v2000, %v1998
  %v2071 = vpack.c.b16 %v2003, %v2001
  %v2072 = vpack.c.b16 %v2004, %v2002
  %v2073 = vpack.c.b16 %v2007, %v2005
  %v2074 = vpack.c.b16 %v2008, %v2006
  %v2075 = vpack.c.b16 %v2011, %v2009
  %v2076 = vpack.c.b16 %v2012, %v2010
  %2141 = vmatprep.subr.bf16.mxu0 %v2014
  %2142 = vmatpush1.bf16.msra.mxu0 %v2013
  %2143 = vmatprep.subr.bf16.mxu0 %v2016
  %2144 = vmatpush1.bf16.msra.mxu0 %v2015
  %2145 = vmatprep.subr.bf16.mxu0 %v2018
  %2146 = vmatpush1.bf16.msra.mxu0 %v2017
  %2147 = vmatprep.subr.bf16.mxu0 %v2020
  %2148 = vmatpush1.bf16.msra.mxu0 %v2019
  %2149 = vmatprep.subr.bf16.mxu0 %v2022
  %2150 = vmatpush1.bf16.msra.mxu0 %v2021
  %2151 = vmatprep.subr.bf16.mxu0 %v2024
  %2152 = vmatpush1.bf16.msra.mxu0 %v2023
  %2153 = vmatprep.subr.bf16.mxu0 %v2026
  %2154 = vmatpush1.bf16.msra.mxu0 %v2025
  %2155 = vmatprep.subr.bf16.mxu0 %v2028
  %2156 = vmatpush1.bf16.msra.mxu0 %v2027
  %2157 = vmatprep.subr.bf16.mxu0 %v2030
  %2158 = vmatpush1.bf16.msra.mxu0 %v2029
  %2159 = vmatprep.subr.bf16.mxu0 %v2032
  %2160 = vmatpush1.bf16.msra.mxu0 %v2031
  %2161 = vmatprep.subr.bf16.mxu0 %v2034
  %2162 = vmatpush1.bf16.msra.mxu0 %v2033
  %2163 = vmatprep.subr.bf16.mxu0 %v2036
  %2164 = vmatpush1.bf16.msra.mxu0 %v2035
  %2165 = vmatprep.subr.bf16.mxu0 %v2038
  %2166 = vmatpush1.bf16.msra.mxu0 %v2037
  %2167 = vmatprep.subr.bf16.mxu0 %v2040
  %2168 = vmatpush1.bf16.msra.mxu0 %v2039
  %2169 = vmatprep.subr.bf16.mxu0 %v2042
  %2170 = vmatpush1.bf16.msra.mxu0 %v2041
  %2171 = vmatprep.subr.bf16.mxu0 %v2044
  %2172 = vmatpush1.bf16.msra.mxu0 %v2043
  %2173 = vmatprep.mubr.bf16.mxu0 %v1741
  %2174 = vmatmul.mubr.bf16.gmra.mrb[0].mxu0 %v1740
  %v2175 = vpop.f32.mrb[0].mxu0
  %v2176 = vadd.f32 %v1814, %v2175
  %v2177 = vpop.f32.mrb[0].mxu0
  %v2178 = vadd.f32 %v1818, %v2177
  %v2179 = vpop.f32.mrb[0].mxu0
  %v2180 = vadd.f32 %v1814, %v2179
  %v2181 = vpop.f32.mrb[0].mxu0
  %v2182 = vadd.f32 %v1818, %v2181
  %2183 = vdwg.mxu0
  %2184 = vmatprep.subr.bf16.mxu0 %v2046
  %2185 = vmatpush1.bf16.msra.mxu0 %v2045
  %2186 = vmatprep.subr.bf16.mxu0 %v2048
  %2187 = vmatpush1.bf16.msra.mxu0 %v2047
  %2188 = vmatprep.subr.bf16.mxu0 %v2050
  %2189 = vmatpush1.bf16.msra.mxu0 %v2049
  %2190 = vmatprep.subr.bf16.mxu0 %v2052
  %2191 = vmatpush1.bf16.msra.mxu0 %v2051
  %2192 = vmatprep.subr.bf16.mxu0 %v2054
  %2193 = vmatpush1.bf16.msra.mxu0 %v2053
  %2194 = vmatprep.subr.bf16.mxu0 %v2056
  %2195 = vmatpush1.bf16.msra.mxu0 %v2055
  %2196 = vmatprep.subr.bf16.mxu0 %v2058
  %2197 = vmatpush1.bf16.msra.mxu0 %v2057
  %2198 = vmatprep.subr.bf16.mxu0 %v2060
  %2199 = vmatpush1.bf16.msra.mxu0 %v2059
  %2200 = vmatprep.subr.bf16.mxu0 %v2062
  %2201 = vmatpush1.bf16.msra.mxu0 %v2061
  %2202 = vmatprep.subr.bf16.mxu0 %v2064
  %2203 = vmatpush1.bf16.msra.mxu0 %v2063
  %2204 = vmatprep.subr.bf16.mxu0 %v2066
  %2205 = vmatpush1.bf16.msra.mxu0 %v2065
  %2206 = vmatprep.subr.bf16.mxu0 %v2068
  %2207 = vmatpush1.bf16.msra.mxu0 %v2067
  %2208 = vmatprep.subr.bf16.mxu0 %v2070
  %2209 = vmatpush1.bf16.msra.mxu0 %v2069
  %2210 = vmatprep.subr.bf16.mxu0 %v2072
  %2211 = vmatpush1.bf16.msra.mxu0 %v2071
  %2212 = vmatprep.subr.bf16.mxu0 %v2074
  %2213 = vmatpush1.bf16.msra.mxu0 %v2073
  %2214 = vmatprep.subr.bf16.mxu0 %v2076
  %2215 = vmatpush1.bf16.msra.mxu0 %v2075
  %2216 = vmatprep.mubr.bf16.mxu0 %v1743
  %2217 = vmatmul.mubr.bf16.gmra.mrb[0].mxu0 %v1742
  %v2218 = vpop.f32.mrb[0].mxu0
  %v2219 = vadd.f32 %v2176, %v2218
  %v2220 = vpop.f32.mrb[0].mxu0
  %v2221 = vadd.f32 %v2178, %v2220
  %v2222 = vpop.f32.mrb[0].mxu0
  %v2223 = vadd.f32 %v2180, %v2222
  %v2224 = vpop.f32.mrb[0].mxu0
  %v2225 = vadd.f32 %v2182, %v2224
  %2226 = vdwg.mxu0
  %v2227 = vmax.f32 %v2219, 0.0
  %v2228 = vmax.f32 %v2221, 0.0
  %v2229 = vmax.f32 %v2223, 0.0
  %v2230 = vmax.f32 %v2225, 0.0
  %v2231 = vpack.c.bf16 %v2229, %v2227
  %v2232 = vpack.c.bf16 %v2230, %v2228
  %s2233 = scalar_lea.vmem %s2, 3
  %v2234 = vld [vmem:[%s2233] ss:$8 sm:$0x3]
  %v2235 = vld [vmem:[%s6] sm:$0xff]
  %v2236 = vld [vmem:[%s6 + $0x8] sm:$0xff]
  %v2237 = vld [vmem:[%s6 + $0x10] sm:$0xff]
  %v2238 = vld [vmem:[%s6 + $0x18] sm:$0xff]
  %v2239 = vld [vmem:[%s6 + $0x20] sm:$0xff]
  %v2240 = vld [vmem:[%s6 + $0x28] sm:$0xff]
  %v2241 = vld [vmem:[%s6 + $0x30] sm:$0xff]
  %v2242 = vld [vmem:[%s6 + $0x38] sm:$0xff]
  %v2243 = vld [vmem:[%s6 + $0x40] sm:$0xff]
  %v2244 = vld [vmem:[%s6 + $0x48] sm:$0xff]
  %v2245 = vld [vmem:[%s6 + $0x50] sm:$0xff]
  %v2246 = vld [vmem:[%s6 + $0x58] sm:$0xff]
  %v2247 = vld [vmem:[%s6 + $0x60] sm:$0xff]
  %v2248 = vld [vmem:[%s6 + $0x68] sm:$0xff]
  %v2249 = vld [vmem:[%s6 + $0x70] sm:$0xff]
  %v2250 = vld [vmem:[%s6 + $0x78] sm:$0xff]
  %v2251 = vld [vmem:[%s6 + $0x80] sm:$0xff]
  %v2252 = vld [vmem:[%s6 + $0x88] sm:$0xff]
  %v2253 = vld [vmem:[%s6 + $0x90] sm:$0xff]
  %v2254 = vld [vmem:[%s6 + $0x98] sm:$0xff]
  %v2255 = vld [vmem:[%s6 + $0xa0] sm:$0xff]
  %v2256 = vld [vmem:[%s6 + $0xa8] sm:$0xff]
  %v2257 = vld [vmem:[%s6 + $0xb0] sm:$0xff]
  %v2258 = vld [vmem:[%s6 + $0xb8] sm:$0xff]
  %v2259 = vld [vmem:[%s6 + $0xc0] sm:$0xff]
  %v2260 = vld [vmem:[%s6 + $0xc8] sm:$0xff]
  %v2261 = vld [vmem:[%s6 + $0xd0] sm:$0xff]
  %v2262 = vld [vmem:[%s6 + $0xd8] sm:$0xff]
  %v2263 = vld [vmem:[%s6 + $0xe0] sm:$0xff]
  %v2264 = vld [vmem:[%s6 + $0xe8] sm:$0xff]
  %v2265 = vld [vmem:[%s6 + $0xf0] sm:$0xff]
  %v2266 = vld [vmem:[%s6 + $0xf8] sm:$0xff]
  %v2268 = vlaneseq
  %v2269 = vshrl.u32 %v2268, 7
  %v2270 = vsub.s32 0, %v2269
  %v2271 = vrot.slane %v2234, %v2270
  %v2272 = vlaneseq
  %v2273 = vshrl.u32 %v2272, 7
  %v2274 = vsub.s32 1, %v2273
  %v2275 = vrot.slane %v2234, %v2274
  %v2310 = vunpack.c.l.b16 %v2235
  %v2311 = vunpack.c.h.b16 %v2235
  %v2312 = vunpack.c.l.b16 %v2236
  %v2313 = vunpack.c.h.b16 %v2236
  %v2314 = vunpack.c.l.b16 %v2237
  %v2315 = vunpack.c.h.b16 %v2237
  %v2316 = vunpack.c.l.b16 %v2238
  %v2317 = vunpack.c.h.b16 %v2238
  %v2318 = vunpack.c.l.b16 %v2239
  %v2319 = vunpack.c.h.b16 %v2239
  %v2320 = vunpack.c.l.b16 %v2240
  %v2321 = vunpack.c.h.b16 %v2240
  %v2322 = vunpack.c.l.b16 %v2241
  %v2323 = vunpack.c.h.b16 %v2241
  %v2324 = vunpack.c.l.b16 %v2242
  %v2325 = vunpack.c.h.b16 %v2242
  %v2326 = vunpack.c.l.b16 %v2243
  %v2327 = vunpack.c.h.b16 %v2243
  %v2328 = vunpack.c.l.b16 %v2244
  %v2329 = vunpack.c.h.b16 %v2244
  %v2330 = vunpack.c.l.b16 %v2245
  %v2331 = vunpack.c.h.b16 %v2245
  %v2332 = vunpack.c.l.b16 %v2246
  %v2333 = vunpack.c.h.b16 %v2246
  %v2334 = vunpack.c.l.b16 %v2247
  %v2335 = vunpack.c.h.b16 %v2247
  %v2336 = vunpack.c.l.b16 %v2248
  %v2337 = vunpack.c.h.b16 %v2248
  %v2338 = vunpack.c.l.b16 %v2249
  %v2339 = vunpack.c.h.b16 %v2249
  %v2340 = vunpack.c.l.b16 %v2250
  %v2341 = vunpack.c.h.b16 %v2250
  %v2342 = vunpack.c.l.b16 %v2251
  %v2343 = vunpack.c.h.b16 %v2251
  %v2344 = vunpack.c.l.b16 %v2252
  %v2345 = vunpack.c.h.b16 %v2252
  %v2346 = vunpack.c.l.b16 %v2253
  %v2347 = vunpack.c.h.b16 %v2253
  %v2348 = vunpack.c.l.b16 %v2254
  %v2349 = vunpack.c.h.b16 %v2254
  %v2350 = vunpack.c.l.b16 %v2255
  %v2351 = vunpack.c.h.b16 %v2255
  %v2352 = vunpack.c.l.b16 %v2256
  %v2353 = vunpack.c.h.b16 %v2256
  %v2354 = vunpack.c.l.b16 %v2257
  %v2355 = vunpack.c.h.b16 %v2257
  %v2356 = vunpack.c.l.b16 %v2258
  %v2357 = vunpack.c.h.b16 %v2258
  %v2358 = vunpack.c.l.b16 %v2259
  %v2359 = vunpack.c.h.b16 %v2259
  %v2360 = vunpack.c.l.b16 %v2260
  %v2361 = vunpack.c.h.b16 %v2260
  %v2362 = vunpack.c.l.b16 %v2261
  %v2363 = vunpack.c.h.b16 %v2261
  %v2364 = vunpack.c.l.b16 %v2262
  %v2365 = vunpack.c.h.b16 %v2262
  %v2366 = vunpack.c.l.b16 %v2263
  %v2367 = vunpack.c.h.b16 %v2263
  %v2368 = vunpack.c.l.b16 %v2264
  %v2369 = vunpack.c.h.b16 %v2264
  %v2370 = vunpack.c.l.b16 %v2265
  %v2371 = vunpack.c.h.b16 %v2265
  %v2372 = vunpack.c.l.b16 %v2266
  %v2373 = vunpack.c.h.b16 %v2266
  %v2374 = vpack.c.b16 %v2312, %v2310
  %v2375 = vpack.c.b16 %v2313, %v2311
  %v2376 = vpack.c.b16 %v2316, %v2314
  %v2377 = vpack.c.b16 %v2317, %v2315
  %v2378 = vpack.c.b16 %v2320, %v2318
  %v2379 = vpack.c.b16 %v2321, %v2319
  %v2380 = vpack.c.b16 %v2324, %v2322
  %v2381 = vpack.c.b16 %v2325, %v2323
  %v2382 = vpack.c.b16 %v2328, %v2326
  %v2383 = vpack.c.b16 %v2329, %v2327
  %v2384 = vpack.c.b16 %v2332, %v2330
  %v2385 = vpack.c.b16 %v2333, %v2331
  %v2386 = vpack.c.b16 %v2336, %v2334
  %v2387 = vpack.c.b16 %v2337, %v2335
  %v2388 = vpack.c.b16 %v2340, %v2338
  %v2389 = vpack.c.b16 %v2341, %v2339
  %v2390 = vpack.c.b16 %v2344, %v2342
  %v2391 = vpack.c.b16 %v2345, %v2343
  %v2392 = vpack.c.b16 %v2348, %v2346
  %v2393 = vpack.c.b16 %v2349, %v2347
  %v2394 = vpack.c.b16 %v2352, %v2350
  %v2395 = vpack.c.b16 %v2353, %v2351
  %v2396 = vpack.c.b16 %v2356, %v2354
  %v2397 = vpack.c.b16 %v2357, %v2355
  %v2398 = vpack.c.b16 %v2360, %v2358
  %v2399 = vpack.c.b16 %v2361, %v2359
  %v2400 = vpack.c.b16 %v2364, %v2362
  %v2401 = vpack.c.b16 %v2365, %v2363
  %v2402 = vpack.c.b16 %v2368, %v2366
  %v2403 = vpack.c.b16 %v2369, %v2367
  %v2404 = vpack.c.b16 %v2372, %v2370
  %v2405 = vpack.c.b16 %v2373, %v2371
  %2438 = vmatprep.subr.bf16.mxu0 %v2375
  %2439 = vmatpush1.bf16.msra.mxu0 %v2374
  %2440 = vmatprep.subr.bf16.mxu0 %v2377
  %2441 = vmatpush1.bf16.msra.mxu0 %v2376
  %2442 = vmatprep.subr.bf16.mxu0 %v2379
  %2443 = vmatpush1.bf16.msra.mxu0 %v2378
  %2444 = vmatprep.subr.bf16.mxu0 %v2381
  %2445 = vmatpush1.bf16.msra.mxu0 %v2380
  %2446 = vmatprep.subr.bf16.mxu0 %v2383
  %2447 = vmatpush1.bf16.msra.mxu0 %v2382
  %2448 = vmatprep.subr.bf16.mxu0 %v2385
  %2449 = vmatpush1.bf16.msra.mxu0 %v2384
  %2450 = vmatprep.subr.bf16.mxu0 %v2387
  %2451 = vmatpush1.bf16.msra.mxu0 %v2386
  %2452 = vmatprep.subr.bf16.mxu0 %v2389
  %2453 = vmatpush1.bf16.msra.mxu0 %v2388
  %2454 = vmatprep.subr.bf16.mxu0 %v2391
  %2455 = vmatpush1.bf16.msra.mxu0 %v2390
  %2456 = vmatprep.subr.bf16.mxu0 %v2393
  %2457 = vmatpush1.bf16.msra.mxu0 %v2392
  %2458 = vmatprep.subr.bf16.mxu0 %v2395
  %2459 = vmatpush1.bf16.msra.mxu0 %v2394
  %2460 = vmatprep.subr.bf16.mxu0 %v2397
  %2461 = vmatpush1.bf16.msra.mxu0 %v2396
  %2462 = vmatprep.subr.bf16.mxu0 %v2399
  %2463 = vmatpush1.bf16.msra.mxu0 %v2398
  %2464 = vmatprep.subr.bf16.mxu0 %v2401
  %2465 = vmatpush1.bf16.msra.mxu0 %v2400
  %2466 = vmatprep.subr.bf16.mxu0 %v2403
  %2467 = vmatpush1.bf16.msra.mxu0 %v2402
  %2468 = vmatprep.subr.bf16.mxu0 %v2405
  %2469 = vmatpush1.bf16.msra.mxu0 %v2404
  %2470 = vmatprep.mubr.bf16.mxu0 %v2232
  %2471 = vmatmul.mubr.bf16.gmra.mrb[0].mxu0 %v2231
  %v2472 = vpop.f32.mrb[0].mxu0
  %v2473 = vadd.f32 %v2271, %v2472
  %v2474 = vpop.f32.mrb[0].mxu0
  %v2475 = vadd.f32 %v2275, %v2474
  %v2476 = vpop.f32.mrb[0].mxu0
  %v2477 = vadd.f32 %v2271, %v2476
  %v2478 = vpop.f32.mrb[0].mxu0
  %v2479 = vadd.f32 %v2275, %v2478
  %2480 = vdwg.mxu0
  %v2481 = vmax.f32 %v2473, 0.0
  %v2482 = vmax.f32 %v2475, 0.0
  %v2483 = vmax.f32 %v2477, 0.0
  %v2484 = vmax.f32 %v2479, 0.0
  %v2485 = vpack.c.bf16 %v2483, %v2481
  %v2486 = vpack.c.bf16 %v2484, %v2482
  %v2487 = vld [vmem:[%s2 + $0x4] ss:$0 sm:$0xff]
  %v2488 = vld [vmem:[%s7] sm:$0xf]
  %v2489 = vld [vmem:[%s7 + $0x4] sm:$0xf]
  %v2490 = vld [vmem:[%s7 + $0x8] sm:$0xf]
  %v2491 = vld [vmem:[%s7 + $0xc] sm:$0xf]
  %v2492 = vld [vmem:[%s7 + $0x10] sm:$0xf]
  %v2493 = vld [vmem:[%s7 + $0x14] sm:$0xf]
  %v2494 = vld [vmem:[%s7 + $0x18] sm:$0xf]
  %v2495 = vld [vmem:[%s7 + $0x1c] sm:$0xf]
  %v2496 = vld [vmem:[%s7 + $0x20] sm:$0xf]
  %v2497 = vld [vmem:[%s7 + $0x24] sm:$0xf]
  %v2498 = vld [vmem:[%s7 + $0x28] sm:$0xf]
  %v2499 = vld [vmem:[%s7 + $0x2c] sm:$0xf]
  %v2500 = vld [vmem:[%s7 + $0x30] sm:$0xf]
  %v2501 = vld [vmem:[%s7 + $0x34] sm:$0xf]
  %v2502 = vld [vmem:[%s7 + $0x38] sm:$0xf]
  %v2503 = vld [vmem:[%s7 + $0x3c] sm:$0xf]
  %v2504 = vld [vmem:[%s7 + $0x40] sm:$0xf]
  %v2505 = vld [vmem:[%s7 + $0x44] sm:$0xf]
  %v2506 = vld [vmem:[%s7 + $0x48] sm:$0xf]
  %v2507 = vld [vmem:[%s7 + $0x4c] sm:$0xf]
  %v2508 = vld [vmem:[%s7 + $0x50] sm:$0xf]
  %v2509 = vld [vmem:[%s7 + $0x54] sm:$0xf]
  %v2510 = vld [vmem:[%s7 + $0x58] sm:$0xf]
  %v2511 = vld [vmem:[%s7 + $0x5c] sm:$0xf]
  %v2512 = vld [vmem:[%s7 + $0x60] sm:$0xf]
  %v2513 = vld [vmem:[%s7 + $0x64] sm:$0xf]
  %v2514 = vld [vmem:[%s7 + $0x68] sm:$0xf]
  %v2515 = vld [vmem:[%s7 + $0x6c] sm:$0xf]
  %v2516 = vld [vmem:[%s7 + $0x70] sm:$0xf]
  %v2517 = vld [vmem:[%s7 + $0x74] sm:$0xf]
  %v2518 = vld [vmem:[%s7 + $0x78] sm:$0xf]
  %v2519 = vld [vmem:[%s7 + $0x7c] sm:$0xf]
  %v2552 = vunpack.c.l.b16 %v2488
  %v2553 = vunpack.c.l.b16 %v2489
  %v2554 = vunpack.c.l.b16 %v2490
  %v2555 = vunpack.c.l.b16 %v2491
  %v2556 = vunpack.c.l.b16 %v2492
  %v2557 = vunpack.c.l.b16 %v2493
  %v2558 = vunpack.c.l.b16 %v2494
  %v2559 = vunpack.c.l.b16 %v2495
  %v2560 = vunpack.c.l.b16 %v2496
  %v2561 = vunpack.c.l.b16 %v2497
  %v2562 = vunpack.c.l.b16 %v2498
  %v2563 = vunpack.c.l.b16 %v2499
  %v2564 = vunpack.c.l.b16 %v2500
  %v2565 = vunpack.c.l.b16 %v2501
  %v2566 = vunpack.c.l.b16 %v2502
  %v2567 = vunpack.c.l.b16 %v2503
  %v2568 = vunpack.c.l.b16 %v2504
  %v2569 = vunpack.c.l.b16 %v2505
  %v2570 = vunpack.c.l.b16 %v2506
  %v2571 = vunpack.c.l.b16 %v2507
  %v2572 = vunpack.c.l.b16 %v2508
  %v2573 = vunpack.c.l.b16 %v2509
  %v2574 = vunpack.c.l.b16 %v2510
  %v2575 = vunpack.c.l.b16 %v2511
  %v2576 = vunpack.c.l.b16 %v2512
  %v2577 = vunpack.c.l.b16 %v2513
  %v2578 = vunpack.c.l.b16 %v2514
  %v2579 = vunpack.c.l.b16 %v2515
  %v2580 = vunpack.c.l.b16 %v2516
  %v2581 = vunpack.c.l.b16 %v2517
  %v2582 = vunpack.c.l.b16 %v2518
  %v2583 = vunpack.c.l.b16 %v2519
  %v2584 = vpack.c.b16 %v2553, %v2552
  %v2585 = vpack.c.b16 %v2555, %v2554
  %v2586 = vpack.c.b16 %v2557, %v2556
  %v2587 = vpack.c.b16 %v2559, %v2558
  %v2588 = vpack.c.b16 %v2561, %v2560
  %v2589 = vpack.c.b16 %v2563, %v2562
  %v2590 = vpack.c.b16 %v2565, %v2564
  %v2591 = vpack.c.b16 %v2567, %v2566
  %v2592 = vpack.c.b16 %v2569, %v2568
  %v2593 = vpack.c.b16 %v2571, %v2570
  %v2594 = vpack.c.b16 %v2573, %v2572
  %v2595 = vpack.c.b16 %v2575, %v2574
  %v2596 = vpack.c.b16 %v2577, %v2576
  %v2597 = vpack.c.b16 %v2579, %v2578
  %v2598 = vpack.c.b16 %v2581, %v2580
  %v2599 = vpack.c.b16 %v2583, %v2582
  %2616 = vmatprep.subr.bf16.mxu0 0
  %2617 = vmatpush1.bf16.msra.mxu0 %v2584
  %2618 = vmatprep.subr.bf16.mxu0 0
  %2619 = vmatpush1.bf16.msra.mxu0 %v2585
  %2620 = vmatprep.subr.bf16.mxu0 0
  %2621 = vmatpush1.bf16.msra.mxu0 %v2586
  %2622 = vmatprep.subr.bf16.mxu0 0
  %2623 = vmatpush1.bf16.msra.mxu0 %v2587
  %2624 = vmatprep.subr.bf16.mxu0 0
  %2625 = vmatpush1.bf16.msra.mxu0 %v2588
  %2626 = vmatprep.subr.bf16.mxu0 0
  %2627 = vmatpush1.bf16.msra.mxu0 %v2589
  %2628 = vmatprep.subr.bf16.mxu0 0
  %2629 = vmatpush1.bf16.msra.mxu0 %v2590
  %2630 = vmatprep.subr.bf16.mxu0 0
  %2631 = vmatpush1.bf16.msra.mxu0 %v2591
  %2632 = vmatprep.subr.bf16.mxu0 0
  %2633 = vmatpush1.bf16.msra.mxu0 %v2592
  %2634 = vmatprep.subr.bf16.mxu0 0
  %2635 = vmatpush1.bf16.msra.mxu0 %v2593
  %2636 = vmatprep.subr.bf16.mxu0 0
  %2637 = vmatpush1.bf16.msra.mxu0 %v2594
  %2638 = vmatprep.subr.bf16.mxu0 0
  %2639 = vmatpush1.bf16.msra.mxu0 %v2595
  %2640 = vmatprep.subr.bf16.mxu0 0
  %2641 = vmatpush1.bf16.msra.mxu0 %v2596
  %2642 = vmatprep.subr.bf16.mxu0 0
  %2643 = vmatpush1.bf16.msra.mxu0 %v2597
  %2644 = vmatprep.subr.bf16.mxu0 0
  %2645 = vmatpush1.bf16.msra.mxu0 %v2598
  %2646 = vmatprep.subr.bf16.mxu0 0
  %2647 = vmatpush1.bf16.msra.mxu0 %v2599
  %2648 = vmatprep.mubr.bf16.mxu0 %v2486
  %2649 = vmatmul.mubr.bf16.gmra.mrb[0].mxu0 %v2485
  %v2650 = vpop.f32.mrb[0].mxu0
  %v2651 = vadd.f32 %v2487, %v2650
  %v2652 = vpop.f32.mrb[0].mxu0
  %v2653 = vpop.f32.mrb[0].mxu0
  %v2654 = vadd.f32 %v2487, %v2653
  %v2655 = vpop.f32.mrb[0].mxu0
  %2656 = vdwg.mxu0
  %v2657 = vmax.f32 %v2651, 0.0
  %v2658 = vmax.f32 %v2654, 0.0
  %v2659 = vpack.c.bf16 %v2658, %v2657
  %v2660 = vld [vmem:[%s2 + $0x5] ss:$0 sm:$0xff]
  %v2661 = vld [vmem:[%s8] sm:$0xf]
  %v2662 = vld [vmem:[%s8 + $0x4] sm:$0xf]
  %v2663 = vld [vmem:[%s8 + $0x8] sm:$0xf]
  %v2664 = vld [vmem:[%s8 + $0xc] sm:$0xf]
  %v2665 = vld [vmem:[%s8 + $0x10] sm:$0xf]
  %v2666 = vld [vmem:[%s8 + $0x14] sm:$0xf]
  %v2667 = vld [vmem:[%s8 + $0x18] sm:$0xf]
  %v2668 = vld [vmem:[%s8 + $0x1c] sm:$0xf]
  %v2669 = vld [vmem:[%s8 + $0x20] sm:$0xf]
  %v2670 = vld [vmem:[%s8 + $0x24] sm:$0xf]
  %v2671 = vld [vmem:[%s8 + $0x28] sm:$0xf]
  %v2672 = vld [vmem:[%s8 + $0x2c] sm:$0xf]
  %v2673 = vld [vmem:[%s8 + $0x30] sm:$0xf]
  %v2674 = vld [vmem:[%s8 + $0x34] sm:$0xf]
  %v2675 = vld [vmem:[%s8 + $0x38] sm:$0xf]
  %v2676 = vld [vmem:[%s8 + $0x3c] sm:$0xf]
  %v2693 = vunpack.c.l.b16 %v2661
  %v2694 = vunpack.c.l.b16 %v2662
  %v2695 = vunpack.c.l.b16 %v2663
  %v2696 = vunpack.c.l.b16 %v2664
  %v2697 = vunpack.c.l.b16 %v2665
  %v2698 = vunpack.c.l.b16 %v2666
  %v2699 = vunpack.c.l.b16 %v2667
  %v2700 = vunpack.c.l.b16 %v2668
  %v2701 = vunpack.c.l.b16 %v2669
  %v2702 = vunpack.c.l.b16 %v2670
  %v2703 = vunpack.c.l.b16 %v2671
  %v2704 = vunpack.c.l.b16 %v2672
  %v2705 = vunpack.c.l.b16 %v2673
  %v2706 = vunpack.c.l.b16 %v2674
  %v2707 = vunpack.c.l.b16 %v2675
  %v2708 = vunpack.c.l.b16 %v2676
  %v2709 = vpack.c.b16 %v2694, %v2693
  %v2710 = vpack.c.b16 %v2696, %v2695
  %v2711 = vpack.c.b16 %v2698, %v2697
  %v2712 = vpack.c.b16 %v2700, %v2699
  %v2713 = vpack.c.b16 %v2702, %v2701
  %v2714 = vpack.c.b16 %v2704, %v2703
  %v2715 = vpack.c.b16 %v2706, %v2705
  %v2716 = vpack.c.b16 %v2708, %v2707
  %2725 = vmatprep.subr.bf16.mxu0 0
  %2726 = vmatpush1.bf16.msra.mxu0 %v2709
  %2727 = vmatprep.subr.bf16.mxu0 0
  %2728 = vmatpush1.bf16.msra.mxu0 %v2710
  %2729 = vmatprep.subr.bf16.mxu0 0
  %2730 = vmatpush1.bf16.msra.mxu0 %v2711
  %2731 = vmatprep.subr.bf16.mxu0 0
  %2732 = vmatpush1.bf16.msra.mxu0 %v2712
  %2733 = vmatprep.subr.bf16.mxu0 0
  %2734 = vmatpush1.bf16.msra.mxu0 %v2713
  %2735 = vmatprep.subr.bf16.mxu0 0
  %2736 = vmatpush1.bf16.msra.mxu0 %v2714
  %2737 = vmatprep.subr.bf16.mxu0 0
  %2738 = vmatpush1.bf16.msra.mxu0 %v2715
  %2739 = vmatprep.subr.bf16.mxu0 0
  %2740 = vmatpush1.bf16.msra.mxu0 %v2716
  %2741 = vmatprep.subr.bf16.mxu0 0
  %2742 = vmatpush1.bf16.msra.mxu0 0
  %2743 = vmatprep.subr.bf16.mxu0 0
  %2744 = vmatpush1.bf16.msra.mxu0 0
  %2745 = vmatprep.subr.bf16.mxu0 0
  %2746 = vmatpush1.bf16.msra.mxu0 0
  %2747 = vmatprep.subr.bf16.mxu0 0
  %2748 = vmatpush1.bf16.msra.mxu0 0
  %2749 = vmatprep.subr.bf16.mxu0 0
  %2750 = vmatpush1.bf16.msra.mxu0 0
  %2751 = vmatprep.subr.bf16.mxu0 0
  %2752 = vmatpush1.bf16.msra.mxu0 0
  %2753 = vmatprep.subr.bf16.mxu0 0
  %2754 = vmatpush1.bf16.msra.mxu0 0
  %2755 = vmatprep.subr.bf16.mxu0 0
  %2756 = vmatpush1.bf16.msra.mxu0 0
  %2757 = vmatprep.mubr.bf16.mxu0 0
  %2758 = vmatmul.mubr.bf16.gmra.mrb[0].mxu0 %v2659
  %v2759 = vpop.f32.mrb[0].mxu0
  %v2760 = vadd.f32 %v2660, %v2759
  %v2761 = vpop.f32.mrb[0].mxu0
  %v2762 = vpop.f32.mrb[0].mxu0
  %v2763 = vadd.f32 %v2660, %v2762
  %v2764 = vpop.f32.mrb[0].mxu0
  %2765 = vdwg.mxu0
  %v2766 = vmax.f32 %v2760, 0.0
  %v2767 = vmax.f32 %v2763, 0.0
  %v2768 = vpack.c.bf16 %v2767, %v2766
  %v2769 = vld [vmem:[%s2 + $0x6] ss:$0 sm:$0xff]
  %v2770 = vld [vmem:[%s9] sm:$0xf]
  %v2771 = vld [vmem:[%s9 + $0x4] sm:$0xf]
  %v2772 = vld [vmem:[%s9 + $0x8] sm:$0xf]
  %v2773 = vld [vmem:[%s9 + $0xc] sm:$0xf]
  %v2774 = vld [vmem:[%s9 + $0x10] sm:$0xf]
  %v2775 = vld [vmem:[%s9 + $0x14] sm:$0xf]
  %v2776 = vld [vmem:[%s9 + $0x18] sm:$0xf]
  %v2777 = vld [vmem:[%s9 + $0x1c] sm:$0xf]
  %v2778 = vld [vmem:[%s9 + $0x20] sm:$0xf]
  %v2779 = vld [vmem:[%s9 + $0x24] sm:$0xf]
  %v2780 = vld [vmem:[%s9 + $0x28] sm:$0xf]
  %v2781 = vld [vmem:[%s9 + $0x2c] sm:$0xf]
  %v2782 = vld [vmem:[%s9 + $0x30] sm:$0xf]
  %v2783 = vld [vmem:[%s9 + $0x34] sm:$0xf]
  %v2784 = vld [vmem:[%s9 + $0x38] sm:$0xf]
  %v2785 = vld [vmem:[%s9 + $0x3c] sm:$0xf]
  %v2802 = vunpack.c.l.b16 %v2770
  %v2803 = vunpack.c.l.b16 %v2771
  %v2804 = vunpack.c.l.b16 %v2772
  %v2805 = vunpack.c.l.b16 %v2773
  %v2806 = vunpack.c.l.b16 %v2774
  %v2807 = vunpack.c.l.b16 %v2775
  %v2808 = vunpack.c.l.b16 %v2776
  %v2809 = vunpack.c.l.b16 %v2777
  %v2810 = vunpack.c.l.b16 %v2778
  %v2811 = vunpack.c.l.b16 %v2779
  %v2812 = vunpack.c.l.b16 %v2780
  %v2813 = vunpack.c.l.b16 %v2781
  %v2814 = vunpack.c.l.b16 %v2782
  %v2815 = vunpack.c.l.b16 %v2783
  %v2816 = vunpack.c.l.b16 %v2784
  %v2817 = vunpack.c.l.b16 %v2785
  %v2818 = vpack.c.b16 %v2803, %v2802
  %v2819 = vpack.c.b16 %v2805, %v2804
  %v2820 = vpack.c.b16 %v2807, %v2806
  %v2821 = vpack.c.b16 %v2809, %v2808
  %v2822 = vpack.c.b16 %v2811, %v2810
  %v2823 = vpack.c.b16 %v2813, %v2812
  %v2824 = vpack.c.b16 %v2815, %v2814
  %v2825 = vpack.c.b16 %v2817, %v2816
  %2834 = vmatprep.subr.bf16.mxu0 0
  %2835 = vmatpush1.bf16.msra.mxu0 %v2818
  %2836 = vmatprep.subr.bf16.mxu0 0
  %2837 = vmatpush1.bf16.msra.mxu0 %v2819
  %2838 = vmatprep.subr.bf16.mxu0 0
  %2839 = vmatpush1.bf16.msra.mxu0 %v2820
  %2840 = vmatprep.subr.bf16.mxu0 0
  %2841 = vmatpush1.bf16.msra.mxu0 %v2821
  %2842 = vmatprep.subr.bf16.mxu0 0
  %2843 = vmatpush1.bf16.msra.mxu0 %v2822
  %2844 = vmatprep.subr.bf16.mxu0 0
  %2845 = vmatpush1.bf16.msra.mxu0 %v2823
  %2846 = vmatprep.subr.bf16.mxu0 0
  %2847 = vmatpush1.bf16.msra.mxu0 %v2824
  %2848 = vmatprep.subr.bf16.mxu0 0
  %2849 = vmatpush1.bf16.msra.mxu0 %v2825
  %2850 = vmatprep.subr.bf16.mxu0 0
  %2851 = vmatpush1.bf16.msra.mxu0 0
  %2852 = vmatprep.subr.bf16.mxu0 0
  %2853 = vmatpush1.bf16.msra.mxu0 0
  %2854 = vmatprep.subr.bf16.mxu0 0
  %2855 = vmatpush1.bf16.msra.mxu0 0
  %2856 = vmatprep.subr.bf16.mxu0 0
  %2857 = vmatpush1.bf16.msra.mxu0 0
  %2858 = vmatprep.subr.bf16.mxu0 0
  %2859 = vmatpush1.bf16.msra.mxu0 0
  %2860 = vmatprep.subr.bf16.mxu0 0
  %2861 = vmatpush1.bf16.msra.mxu0 0
  %2862 = vmatprep.subr.bf16.mxu0 0
  %2863 = vmatpush1.bf16.msra.mxu0 0
  %2864 = vmatprep.subr.bf16.mxu0 0
  %2865 = vmatpush1.bf16.msra.mxu0 0
  %2866 = vmatprep.mubr.bf16.mxu0 0
  %2867 = vmatmul.mubr.bf16.gmra.mrb[0].mxu0 %v2768
  %v2868 = vpop.f32.mrb[0].mxu0
  %v2869 = vadd.f32 %v2769, %v2868
  %v2870 = vpop.f32.mrb[0].mxu0
  %v2871 = vpop.f32.mrb[0].mxu0
  %v2872 = vadd.f32 %v2769, %v2871
  %v2873 = vpop.f32.mrb[0].mxu0
  %2874 = vdwg.mxu0
  %v2875 = vmax.f32 %v2869, 0.0
  %v2876 = vmax.f32 %v2872, 0.0
  %v2877 = vpack.c.bf16 %v2876, %v2875
  %v2878 = vld [vmem:[%s2 + $0x7] ss:$0 sm:$0xff]
  %v2879 = vld [vmem:[%s10] sm:$0xf]
  %v2880 = vld [vmem:[%s10 + $0x4] sm:$0xf]
  %v2881 = vld [vmem:[%s10 + $0x8] sm:$0xf]
  %v2882 = vld [vmem:[%s10 + $0xc] sm:$0xf]
  %v2883 = vld [vmem:[%s10 + $0x10] sm:$0xf]
  %v2884 = vld [vmem:[%s10 + $0x14] sm:$0xf]
  %v2885 = vld [vmem:[%s10 + $0x18] sm:$0xf]
  %v2886 = vld [vmem:[%s10 + $0x1c] sm:$0xf]
  %v2895 = vunpack.c.l.b16 %v2879
  %v2896 = vunpack.c.l.b16 %v2880
  %v2897 = vunpack.c.l.b16 %v2881
  %v2898 = vunpack.c.l.b16 %v2882
  %v2899 = vunpack.c.l.b16 %v2883
  %v2900 = vunpack.c.l.b16 %v2884
  %v2901 = vunpack.c.l.b16 %v2885
  %v2902 = vunpack.c.l.b16 %v2886
  %v2903 = vpack.c.b16 %v2896, %v2895
  %v2904 = vpack.c.b16 %v2898, %v2897
  %v2905 = vpack.c.b16 %v2900, %v2899
  %v2906 = vpack.c.b16 %v2902, %v2901
  %vm2911 = vcmask 523264
  %v2913 = vsel %vm2911, %v2877, 0
  %2915 = vmatprep.subr.bf16.mxu0 0
  %2916 = vmatpush1.bf16.msra.mxu0 %v2903
  %2917 = vmatprep.subr.bf16.mxu0 0
  %2918 = vmatpush1.bf16.msra.mxu0 %v2904
  %2919 = vmatprep.subr.bf16.mxu0 0
  %2920 = vmatpush1.bf16.msra.mxu0 %v2905
  %2921 = vmatprep.subr.bf16.mxu0 0
  %2922 = vmatpush1.bf16.msra.mxu0 %v2906
  %2923 = vmatprep.subr.bf16.mxu0 0
  %2924 = vmatpush1.bf16.msra.mxu0 0
  %2925 = vmatprep.subr.bf16.mxu0 0
  %2926 = vmatpush1.bf16.msra.mxu0 0
  %2927 = vmatprep.subr.bf16.mxu0 0
  %2928 = vmatpush1.bf16.msra.mxu0 0
  %2929 = vmatprep.subr.bf16.mxu0 0
  %2930 = vmatpush1.bf16.msra.mxu0 0
  %2931 = vmatprep.subr.bf16.mxu0 0
  %2932 = vmatpush1.bf16.msra.mxu0 0
  %2933 = vmatprep.subr.bf16.mxu0 0
  %2934 = vmatpush1.bf16.msra.mxu0 0
  %2935 = vmatprep.subr.bf16.mxu0 0
  %2936 = vmatpush1.bf16.msra.mxu0 0
  %2937 = vmatprep.subr.bf16.mxu0 0
  %2938 = vmatpush1.bf16.msra.mxu0 0
  %2939 = vmatprep.subr.bf16.mxu0 0
  %2940 = vmatpush1.bf16.msra.mxu0 0
  %2941 = vmatprep.subr.bf16.mxu0 0
  %2942 = vmatpush1.bf16.msra.mxu0 0
  %2943 = vmatprep.subr.bf16.mxu0 0
  %2944 = vmatpush1.bf16.msra.mxu0 0
  %2945 = vmatprep.subr.bf16.mxu0 0
  %2946 = vmatpush1.bf16.msra.mxu0 0
  %2947 = vmatprep.mubr.bf16.mxu0 0
  %2948 = vmatmul.mubr.bf16.gmra.mrb[0].mxu0 %v2913
  %v2949 = vpop.f32.mrb[0].mxu0
  %v2950 = vadd.f32 %v2878, %v2949
  %v2951 = vpop.f32.mrb[0].mxu0
  %v2952 = vpop.f32.mrb[0].mxu0
  %v2953 = vadd.f32 %v2878, %v2952
  %v2954 = vpop.f32.mrb[0].mxu0
  %2955 = vdwg.mxu0
  %v2956 = vmax.f32 %v2950, 0.0
  %v2957 = vmax.f32 %v2953, 0.0
  %v2958 = vpack.c.bf16 %v2957, %v2956
  %v2959 = vld [vmem:[%s2 + $0x20] ss:$0 sm:$0xff]
  %v2960 = vld [vmem:[%s11] sm:$0xf]
  %v2961 = vld [vmem:[%s11 + $0x4] sm:$0xf]
  %v2962 = vld [vmem:[%s11 + $0x8] sm:$0xf]
  %v2963 = vld [vmem:[%s11 + $0xc] sm:$0xf]
  %v2964 = vld [vmem:[%s11 + $0x10] sm:$0xf]
  %v2965 = vld [vmem:[%s11 + $0x14] sm:$0xf]
  %v2966 = vld [vmem:[%s11 + $0x18] sm:$0xf]
  %v2967 = vld [vmem:[%s11 + $0x1c] sm:$0xf]
  %v2976 = vunpack.c.l.b16 %v2960
  %v2977 = vunpack.c.l.b16 %v2961
  %v2978 = vunpack.c.l.b16 %v2962
  %v2979 = vunpack.c.l.b16 %v2963
  %v2980 = vunpack.c.l.b16 %v2964
  %v2981 = vunpack.c.l.b16 %v2965
  %v2982 = vunpack.c.l.b16 %v2966
  %v2983 = vunpack.c.l.b16 %v2967
  %v2984 = vpack.c.b16 %v2977, %v2976
  %v2985 = vpack.c.b16 %v2979, %v2978
  %v2986 = vpack.c.b16 %v2981, %v2980
  %v2987 = vpack.c.b16 %v2983, %v2982
  %v2993 = vsel %vm2911, %v2958, 0
  %2995 = vmatprep.subr.bf16.mxu0 0
  %2996 = vmatpush1.bf16.msra.mxu0 %v2984
  %2997 = vmatprep.subr.bf16.mxu0 0
  %2998 = vmatpush1.bf16.msra.mxu0 %v2985
  %2999 = vmatprep.subr.bf16.mxu0 0
  %3000 = vmatpush1.bf16.msra.mxu0 %v2986
  %3001 = vmatprep.subr.bf16.mxu0 0
  %3002 = vmatpush1.bf16.msra.mxu0 %v2987
  %3003 = vmatprep.subr.bf16.mxu0 0
  %3004 = vmatpush1.bf16.msra.mxu0 0
  %3005 = vmatprep.subr.bf16.mxu0 0
  %3006 = vmatpush1.bf16.msra.mxu0 0
  %3007 = vmatprep.subr.bf16.mxu0 0
  %3008 = vmatpush1.bf16.msra.mxu0 0
  %3009 = vmatprep.subr.bf16.mxu0 0
  %3010 = vmatpush1.bf16.msra.mxu0 0
  %3011 = vmatprep.subr.bf16.mxu0 0
  %3012 = vmatpush1.bf16.msra.mxu0 0
  %3013 = vmatprep.subr.bf16.mxu0 0
  %3014 = vmatpush1.bf16.msra.mxu0 0
  %3015 = vmatprep.subr.bf16.mxu0 0
  %3016 = vmatpush1.bf16.msra.mxu0 0
  %3017 = vmatprep.subr.bf16.mxu0 0
  %3018 = vmatpush1.bf16.msra.mxu0 0
  %3019 = vmatprep.subr.bf16.mxu0 0
  %3020 = vmatpush1.bf16.msra.mxu0 0
  %3021 = vmatprep.subr.bf16.mxu0 0
  %3022 = vmatpush1.bf16.msra.mxu0 0
  %3023 = vmatprep.subr.bf16.mxu0 0
  %3024 = vmatpush1.bf16.msra.mxu0 0
  %3025 = vmatprep.subr.bf16.mxu0 0
  %3026 = vmatpush1.bf16.msra.mxu0 0
  %3027 = vmatprep.mubr.bf16.mxu0 0
  %3028 = vmatmul.mubr.bf16.gmra.mrb[0].mxu0 %v2993
  %v3029 = vpop.f32.mrb[0].mxu0
  %v3030 = vadd.f32 %v2959, %v3029
  %v3031 = vpop.f32.mrb[0].mxu0
  %v3032 = vpop.f32.mrb[0].mxu0
  %v3033 = vadd.f32 %v2959, %v3032
  %v3034 = vpop.f32.mrb[0].mxu0
  %3035 = vdwg.mxu0
  %v3036 = vmax.f32 %v3030, 0.0
  %v3037 = vmax.f32 %v3033, 0.0
  %v3038 = vpack.c.bf16 %v3037, %v3036
  %v3039 = vld [vmem:[%s2 + $0x21] ss:$0 sm:$0xff]
  %v3040 = vld [vmem:[%s12] sm:$0xf]
  %v3041 = vld [vmem:[%s12 + $0x4] sm:$0xf]
  %v3042 = vld [vmem:[%s12 + $0x8] sm:$0xf]
  %v3043 = vld [vmem:[%s12 + $0xc] sm:$0xf]
  %v3044 = vld [vmem:[%s12 + $0x10] sm:$0xf]
  %v3045 = vld [vmem:[%s12 + $0x14] sm:$0xf]
  %v3046 = vld [vmem:[%s12 + $0x18] sm:$0xf]
  %v3047 = vld [vmem:[%s12 + $0x1c] sm:$0xf]
  %v3056 = vunpack.c.l.b16 %v3040
  %v3057 = vunpack.c.l.b16 %v3041
  %v3058 = vunpack.c.l.b16 %v3042
  %v3059 = vunpack.c.l.b16 %v3043
  %v3060 = vunpack.c.l.b16 %v3044
  %v3061 = vunpack.c.l.b16 %v3045
  %v3062 = vunpack.c.l.b16 %v3046
  %v3063 = vunpack.c.l.b16 %v3047
  %v3064 = vpack.c.b16 %v3057, %v3056
  %v3065 = vpack.c.b16 %v3059, %v3058
  %v3066 = vpack.c.b16 %v3061, %v3060
  %v3067 = vpack.c.b16 %v3063, %v3062
  %v3073 = vsel %vm2911, %v3038, 0
  %3075 = vmatprep.subr.bf16.mxu0 0
  %3076 = vmatpush1.bf16.msra.mxu0 %v3064
  %3077 = vmatprep.subr.bf16.mxu0 0
  %3078 = vmatpush1.bf16.msra.mxu0 %v3065
  %3079 = vmatprep.subr.bf16.mxu0 0
  %3080 = vmatpush1.bf16.msra.mxu0 %v3066
  %3081 = vmatprep.subr.bf16.mxu0 0
  %3082 = vmatpush1.bf16.msra.mxu0 %v3067
  %3083 = vmatprep.subr.bf16.mxu0 0
  %3084 = vmatpush1.bf16.msra.mxu0 0
  %3085 = vmatprep.subr.bf16.mxu0 0
  %3086 = vmatpush1.bf16.msra.mxu0 0
  %3087 = vmatprep.subr.bf16.mxu0 0
  %3088 = vmatpush1.bf16.msra.mxu0 0
  %3089 = vmatprep.subr.bf16.mxu0 0
  %3090 = vmatpush1.bf16.msra.mxu0 0
  %3091 = vmatprep.subr.bf16.mxu0 0
  %3092 = vmatpush1.bf16.msra.mxu0 0
  %3093 = vmatprep.subr.bf16.mxu0 0
  %3094 = vmatpush1.bf16.msra.mxu0 0
  %3095 = vmatprep.subr.bf16.mxu0 0
  %3096 = vmatpush1.bf16.msra.mxu0 0
  %3097 = vmatprep.subr.bf16.mxu0 0
  %3098 = vmatpush1.bf16.msra.mxu0 0
  %3099 = vmatprep.subr.bf16.mxu0 0
  %3100 = vmatpush1.bf16.msra.mxu0 0
  %3101 = vmatprep.subr.bf16.mxu0 0
  %3102 = vmatpush1.bf16.msra.mxu0 0
  %3103 = vmatprep.subr.bf16.mxu0 0
  %3104 = vmatpush1.bf16.msra.mxu0 0
  %3105 = vmatprep.subr.bf16.mxu0 0
  %3106 = vmatpush1.bf16.msra.mxu0 0
  %3107 = vmatprep.mubr.bf16.mxu0 0
  %3108 = vmatmul.mubr.bf16.gmra.mrb[0].mxu0 %v3073
  %v3109 = vpop.f32.mrb[0].mxu0
  %v3110 = vadd.f32 %v3039, %v3109
  %v3111 = vpop.f32.mrb[0].mxu0
  %v3112 = vpop.f32.mrb[0].mxu0
  %v3113 = vadd.f32 %v3039, %v3112
  %v3114 = vpop.f32.mrb[0].mxu0
  %3115 = vdwg.mxu0
  %v3116 = vld [vmem:[%s1] sm:$0xff]
  %v3117 = vld [vmem:[%s1 + $0x8] sm:$0xff]
  %v3118 = vadd.f32 %v3110, %v3116
  %v3119 = vadd.f32 %v3113, %v3117
  %vm3120 = vcmask 31744
  %3121 = vst.msk [vmem:[%s13] sm:$0xff] %vm3120, %v3118
  %3122 = vst.msk [vmem:[%s13 + $0x8] sm:$0xff] %vm3120, %v3119
  // Predicated region
  $region54: #{funknn_forward.1} parent=0 // pred_check
    _
  $region55: #{funknn_forward.1} parent=0 // pred_check_branch
    %3124 = sbr.rel (0) target = $region57
  $region56: #{funknn_forward.1} parent=0 // pred_region
    _
  $region57: #{funknn_forward.1} parent=0 // pred_fallthru
    _
  // Predicated region
  $region58: #{funknn_forward.1} parent=0 // pred_check
    _
  $region59: #{funknn_forward.1} parent=0 // pred_check_branch
    %3126 = sbr.rel (0) target = $region61
  $region60: #{funknn_forward.1} parent=0 // pred_region
    _
  $region61: #{funknn_forward.1} parent=0 // pred_fallthru
    _

</llo_original>
